<compile_context>
chip_gen: v6e
topology: v6e:2x2x1
jax: 0.10.0
libtpu: 0.0.40
codegen_flags: <defaults>
</compile_context>

<pallas_src>
import functools
import math

import jax
import jax.numpy as jnp
from jax import lax
from jax.experimental import pallas as pl
from jax.experimental.pallas import tpu as pltpu

F32 = jnp.float32
BF16 = jnp.bfloat16


# ----------------------------- Kernel -----------------------------
# One grid step = (one sequence, one encoder layer).  Hidden state for the
# current sequence lives in a VMEM scratch across the layer axis.

def _bert_layer_kernel(
        emb_ref, emb_g_ref, emb_b_ref,
        wqkv_ref, bqkv_ref, wo_ref, bo_ref, ln1_g_ref, ln1_b_ref,
        wi_ref, bi_ref, wo2_ref, bo2_ref, ln2_g_ref, ln2_b_ref,
        pool_w_ref, pool_b_ref, cls_w_ref, cls_b_ref,
        out_ref,
        x_ref,
        *, heads, eps):
    l = pl.program_id(1)
    n_layers = pl.num_programs(1)
    seq, hidden = x_ref.shape
    dh = hidden // heads
    scale = 1.0 / math.sqrt(dh)

    def layernorm(v, g, b):
        mean = jnp.mean(v, axis=-1, keepdims=True)
        vc = v - mean
        var = jnp.mean(vc * vc, axis=-1, keepdims=True)
        return vc * lax.rsqrt(var + eps) * g + b

    def gelu(v):  # exact erf GELU, matches HF BertConfig(hidden_act="gelu")
        return 0.5 * v * (1.0 + lax.erf(v * (1.0 / math.sqrt(2.0))))

    # ---- embedding LayerNorm once per sequence (first layer step) ----
    @pl.when(l == 0)
    def _():
        x_ref[...] = layernorm(emb_ref[0], emb_g_ref[...], emb_b_ref[...])

    x = x_ref[...]                                                   # (S, H) f32

    # ---- self-attention (single sequence, all heads) ----
    qkv = (jnp.dot(x.astype(BF16), wqkv_ref[0],
                   preferred_element_type=F32) + bqkv_ref[0])        # (S, 3H)

    ctx_parts = []
    for h in range(heads):
        c = h * dh
        qh = qkv[:, c:c + dh].astype(BF16)
        kh = qkv[:, hidden + c:hidden + c + dh].astype(BF16)
        vh = qkv[:, 2 * hidden + c:2 * hidden + c + dh].astype(BF16)
        # q @ k^T: contract on dh for BOTH operands (transpose absorbed by MXU)
        s = lax.dot_general(qh, kh, (((1,), (1,)), ((), ())),
                            preferred_element_type=F32) * scale      # (S, S)
        s = s - jnp.max(s, axis=-1, keepdims=True)
        p = jnp.exp(s)
        p = p * pl.reciprocal(jnp.sum(p, axis=-1, keepdims=True), approx=True)
        ctx_parts.append(jnp.dot(p.astype(BF16), vh,
                                 preferred_element_type=F32))        # (S, dh)
    # heads re-assembled on adjacent lanes -> ONE full-width output projection
    ctx = jnp.concatenate(ctx_parts, axis=-1)                        # (S, H)
    attn = (jnp.dot(ctx.astype(BF16), wo_ref[0],
                    preferred_element_type=F32) + bo_ref[0])
    x = layernorm(attn + x, ln1_g_ref[0], ln1_b_ref[0])

    # ---- feed-forward ----
    inter = gelu(jnp.dot(x.astype(BF16), wi_ref[0],
                         preferred_element_type=F32) + bi_ref[0])    # (S, I)
    ffn = (jnp.dot(inter.astype(BF16), wo2_ref[0],
                   preferred_element_type=F32) + bo2_ref[0])
    x = layernorm(ffn + x, ln2_g_ref[0], ln2_b_ref[0])
    x_ref[...] = x

    # ---- pooler ([CLS] token) + classification head on last layer ----
    @pl.when(l == n_layers - 1)
    def _():
        cls_tok = x[0:1, :]                                          # (1, H)
        pooled = jnp.tanh(
            jnp.dot(cls_tok.astype(BF16), pool_w_ref[...],
                    preferred_element_type=F32) + pool_b_ref[...])
        logits = (jnp.dot(pooled.astype(BF16), cls_w_ref[...],
                          preferred_element_type=F32) + cls_b_ref[...])
        out_ref[...] = logits.reshape(out_ref.shape).astype(out_ref.dtype)


# ----------------------------- Wrapper -----------------------------

def bert_benchmark_forward(params, input_ids, cfg):
    B, S = input_ids.shape
    H, nH, L, C = cfg["hidden"], cfg["heads"], cfg["layers"], cfg["classes"]
    CP = 128  # lane-padded classifier width (unmasked stores)

    # Embedding gather (token + position + token_type==0) outside the kernel.
    # TODO(synk): for production vocab sizes, gather rows via scalar-prefetch DMA
    emb = (params["word_emb"][input_ids]
           + params["pos_emb"][:S][None, :, :]
           + params["type_emb"][0][None, None, :]).astype(F32)        # (B, S, H)

    cls_w_pad = jnp.zeros((H, CP), BF16).at[:, :C].set(params["cls_w"])
    cls_b_pad = jnp.zeros((1, CP), F32).at[0, :C].set(params["cls_b"])

    inputs = (
        emb,
        params["emb_ln_g"].reshape(1, H), params["emb_ln_b"].reshape(1, H),
        params["wqkv"], params["bqkv"],
        params["wo"], params["bo"],
        params["ln1_g"], params["ln1_b"],
        params["wi"], params["bi"],
        params["wo2"], params["bo2"],
        params["ln2_g"], params["ln2_b"],
        params["pool_w"], params["pool_b"].reshape(1, H),
        cls_w_pad, cls_b_pad,
    )

    def seq_spec(shape):          # block indexed by the batch (sequence) axis
        nd = len(shape)
        return pl.BlockSpec((1,) + tuple(shape[1:]),
                            lambda b, l, _nd=nd: (b,) + (0,) * (_nd - 1))

    def layer_spec(shape):        # block indexed by the layer axis (pipelined DMA)
        nd = len(shape)
        return pl.BlockSpec((1,) + tuple(shape[1:]),
                            lambda b, l, _nd=nd: (l,) + (0,) * (_nd - 1))

    def const_spec(shape):        # resident for the whole kernel
        nd = len(shape)
        return pl.BlockSpec(tuple(shape), lambda b, l, _nd=nd: (0,) * _nd)

    in_specs = [
        seq_spec(emb.shape),
        const_spec((1, H)), const_spec((1, H)),
        layer_spec(params["wqkv"].shape), layer_spec(params["bqkv"].shape),
        layer_spec(params["wo"].shape), layer_spec(params["bo"].shape),
        layer_spec(params["ln1_g"].shape), layer_spec(params["ln1_b"].shape),
        layer_spec(params["wi"].shape), layer_spec(params["bi"].shape),
        layer_spec(params["wo2"].shape), layer_spec(params["bo2"].shape),
        layer_spec(params["ln2_g"].shape), layer_spec(params["ln2_b"].shape),
        const_spec((H, H)), const_spec((1, H)),
        const_spec((H, CP)), const_spec((1, CP)),
    ]

    kernel = functools.partial(_bert_layer_kernel, heads=nH, eps=1e-12)

    out = pl.pallas_call(
        kernel,
        grid_spec=pltpu.PrefetchScalarGridSpec(
            num_scalar_prefetch=0,
            grid=(B, L),
            in_specs=in_specs,
            out_specs=pl.BlockSpec((1, 1, CP), lambda b, l: (b, 0, 0)),
            scratch_shapes=[pltpu.VMEM((S, H), F32)],
        ),
        out_shape=jax.ShapeDtypeStruct((B, 1, CP), F32),
        compiler_params=pltpu.CompilerParams(
            dimension_semantics=("parallel", "arbitrary"),
            vmem_limit_bytes=32 * 1024 * 1024),
    )(*inputs)

    return out.reshape(B, CP)[:, :C]


# ----------------------------- Parameters -----------------------------

def make_params(key, cfg):
    H, I, C, L = cfg["hidden"], cfg["intermediate"], cfg["classes"], cfg["layers"]
    keys = iter(jax.random.split(key, 64))

    def nrm(shape, dtype=BF16):
        return (0.02 * jax.random.normal(next(keys), shape, dtype=F32)).astype(dtype)

    return dict(
        word_emb=nrm((cfg["vocab"], H), F32),
        pos_emb=nrm((cfg["max_pos"], H), F32),
        type_emb=nrm((2, H), F32),
        emb_ln_g=jnp.ones((H,), F32),
        emb_ln_b=jnp.zeros((H,), F32),
        # packed QKV projection (wq | wk | wv) -> one matmul per layer, bf16 weights
        wqkv=nrm((L, H, 3 * H)),
        bqkv=jnp.zeros((L, 1, 3 * H), F32),
        wo=nrm((L, H, H)),
        bo=jnp.zeros((L, 1, H), F32),
        ln1_g=jnp.ones((L, 1, H), F32),
        ln1_b=jnp.zeros((L, 1, H), F32),
        wi=nrm((L, H, I)),
        bi=jnp.zeros((L, 1, I), F32),
        wo2=nrm((L, I, H)),
        bo2=jnp.zeros((L, 1, H), F32),
        ln2_g=jnp.ones((L, 1, H), F32),
        ln2_b=jnp.zeros((L, 1, H), F32),
        pool_w=nrm((H, H)),
        pool_b=jnp.zeros((H,), F32),
        cls_w=nrm((H, C)),
        cls_b=jnp.zeros((C,), F32),
    )


# ----------------------------- Main -----------------------------

if __name__ == "__main__":
    cfg = dict(vocab=128, max_pos=64, hidden=32, heads=2, layers=2,
               intermediate=128, classes=8)
    batch, seq = 2, 8

    key = jax.random.PRNGKey(0)
    k_ids, k_params = jax.random.split(key)
    input_ids = jax.random.randint(k_ids, (batch, seq), 0, cfg["vocab"],
                                   dtype=jnp.int32)
    params = make_params(k_params, cfg)

    out = bert_benchmark_forward(params, input_ids, cfg)
    out = jax.block_until_ready(out)
    assert out.shape == (batch, cfg["classes"]) and out.dtype == jnp.float32
    assert bool(jnp.all(jnp.isfinite(out)))
    print("KERNEL_OK")
</pallas_src>

<mosaic_0001>
module attributes {stable_mosaic.version = 11 : i64} {
  func.func @_bert_layer_kernel(%arg0: i32, %arg1: i32, %arg2: memref<1x8x32xf32, #tpu.memory_space<vmem>>, %arg3: memref<1x32xf32, #tpu.memory_space<vmem>>, %arg4: memref<1x32xf32, #tpu.memory_space<vmem>>, %arg5: memref<1x32x96xbf16, #tpu.memory_space<vmem>>, %arg6: memref<1x1x96xf32, #tpu.memory_space<vmem>>, %arg7: memref<1x32x32xbf16, #tpu.memory_space<vmem>>, %arg8: memref<1x1x32xf32, #tpu.memory_space<vmem>>, %arg9: memref<1x1x32xf32, #tpu.memory_space<vmem>>, %arg10: memref<1x1x32xf32, #tpu.memory_space<vmem>>, %arg11: memref<1x32x128xbf16, #tpu.memory_space<vmem>>, %arg12: memref<1x1x128xf32, #tpu.memory_space<vmem>>, %arg13: memref<1x128x32xbf16, #tpu.memory_space<vmem>>, %arg14: memref<1x1x32xf32, #tpu.memory_space<vmem>>, %arg15: memref<1x1x32xf32, #tpu.memory_space<vmem>>, %arg16: memref<1x1x32xf32, #tpu.memory_space<vmem>>, %arg17: memref<32x32xbf16, #tpu.memory_space<vmem>>, %arg18: memref<1x32xf32, #tpu.memory_space<vmem>>, %arg19: memref<32x128xbf16, #tpu.memory_space<vmem>>, %arg20: memref<1x128xf32, #tpu.memory_space<vmem>>, %arg21: memref<1x1x128xf32, #tpu.memory_space<vmem>>, %arg22: memref<8x32xf32, #tpu.memory_space<vmem>>) attributes {dimension_semantics = [#tpu.dimension_semantics<parallel>, #tpu.dimension_semantics<arbitrary>], iteration_bounds = array<i64: 2, 2>, scalar_prefetch = 0 : i64, scratch_operands = 1 : i64, tpu.core_type = #tpu.core_type<tc>, window_params = [{transform_indices = @transform_0, window_bounds = array<i64: 1, 8, 32>}, {pipeline_mode = #tpu.pipeline_mode<synchronous>, transform_indices = @transform_1, window_bounds = array<i64: 1, 32>}, {pipeline_mode = #tpu.pipeline_mode<synchronous>, transform_indices = @transform_2, window_bounds = array<i64: 1, 32>}, {transform_indices = @transform_3, window_bounds = array<i64: 1, 32, 96>}, {transform_indices = @transform_4, window_bounds = array<i64: 1, 1, 96>}, {transform_indices = @transform_5, window_bounds = array<i64: 1, 32, 32>}, {transform_indices = @transform_6, window_bounds = array<i64: 1, 1, 32>}, {transform_indices = @transform_7, window_bounds = array<i64: 1, 1, 32>}, {transform_indices = @transform_8, window_bounds = array<i64: 1, 1, 32>}, {transform_indices = @transform_9, window_bounds = array<i64: 1, 32, 128>}, {transform_indices = @transform_10, window_bounds = array<i64: 1, 1, 128>}, {transform_indices = @transform_11, window_bounds = array<i64: 1, 128, 32>}, {transform_indices = @transform_12, window_bounds = array<i64: 1, 1, 32>}, {transform_indices = @transform_13, window_bounds = array<i64: 1, 1, 32>}, {transform_indices = @transform_14, window_bounds = array<i64: 1, 1, 32>}, {pipeline_mode = #tpu.pipeline_mode<synchronous>, transform_indices = @transform_15, window_bounds = array<i64: 32, 32>}, {pipeline_mode = #tpu.pipeline_mode<synchronous>, transform_indices = @transform_16, window_bounds = array<i64: 1, 32>}, {pipeline_mode = #tpu.pipeline_mode<synchronous>, transform_indices = @transform_17, window_bounds = array<i64: 32, 128>}, {pipeline_mode = #tpu.pipeline_mode<synchronous>, transform_indices = @transform_18, window_bounds = array<i64: 1, 128>}, {transform_indices = @transform_19, window_bounds = array<i64: 1, 1, 128>}]} {
    %c0_i32 = arith.constant 0 : i32
    %0 = arith.cmpi eq, %arg1, %c0_i32 : i32
    %1 = arith.extui %0 : i1 to i32
    %c0_i32_0 = arith.constant 0 : i32
    %2 = arith.cmpi ne, %1, %c0_i32_0 : i32
    scf.if %2 {
      %c0_67 = arith.constant 0 : index
      %c0_68 = arith.constant 0 : index
      %c0_69 = arith.constant 0 : index
      %141 = vector.load %arg2[%c0_67, %c0_68, %c0_69] : memref<1x8x32xf32, #tpu.memory_space<vmem>>, vector<1x8x32xf32>
      %142 = vector.shape_cast %141 : vector<1x8x32xf32> to vector<8x32xf32>
      %c0_70 = arith.constant 0 : index
      %c0_71 = arith.constant 0 : index
      %143 = vector.load %arg3[%c0_70, %c0_71] : memref<1x32xf32, #tpu.memory_space<vmem>>, vector<1x32xf32>
      %c0_72 = arith.constant 0 : index
      %c0_73 = arith.constant 0 : index
      %144 = vector.load %arg4[%c0_72, %c0_73] : memref<1x32xf32, #tpu.memory_space<vmem>>, vector<1x32xf32>
      %cst_74 = arith.constant dense<0.000000e+00> : vector<8xf32>
      %145 = vector.multi_reduction <add>, %142, %cst_74 [1] : vector<8x32xf32> to vector<8xf32>
      %146 = vector.shape_cast %145 : vector<8xf32> to vector<8x1xf32>
      %cst_75 = arith.constant 3.200000e+01 : f32
      %147 = vector.broadcast %cst_75 : f32 to vector<8x1xf32>
      %148 = arith.divf %146, %147 : vector<8x1xf32>
      %149 = vector.broadcast %148 : vector<8x1xf32> to vector<8x32xf32>
      %150 = arith.subf %142, %149 : vector<8x32xf32>
      %151 = arith.mulf %150, %150 : vector<8x32xf32>
      %cst_76 = arith.constant dense<0.000000e+00> : vector<8xf32>
      %152 = vector.multi_reduction <add>, %151, %cst_76 [1] : vector<8x32xf32> to vector<8xf32>
      %153 = vector.shape_cast %152 : vector<8xf32> to vector<8x1xf32>
      %cst_77 = arith.constant 3.200000e+01 : f32
      %154 = vector.broadcast %cst_77 : f32 to vector<8x1xf32>
      %155 = arith.divf %153, %154 : vector<8x1xf32>
      %cst_78 = arith.constant 9.99999996E-13 : f32
      %156 = vector.broadcast %cst_78 : f32 to vector<8x1xf32>
      %157 = arith.addf %155, %156 : vector<8x1xf32>
      %158 = math.rsqrt %157 : vector<8x1xf32>
      %159 = vector.broadcast %158 : vector<8x1xf32> to vector<8x32xf32>
      %160 = arith.mulf %150, %159 : vector<8x32xf32>
      %161 = vector.broadcast %143 : vector<1x32xf32> to vector<8x32xf32>
      %162 = arith.mulf %160, %161 : vector<8x32xf32>
      %163 = vector.broadcast %144 : vector<1x32xf32> to vector<8x32xf32>
      %164 = arith.addf %162, %163 : vector<8x32xf32>
      %c0_79 = arith.constant 0 : index
      %c0_80 = arith.constant 0 : index
      %165 = vector.load %arg22[%c0_79, %c0_80] : memref<8x32xf32, #tpu.memory_space<vmem>>, vector<8x32xf32>
      tpu.vector_store %arg22[%c0_79, %c0_80], %164 {strides = array<i32>} : memref<8x32xf32, #tpu.memory_space<vmem>>, vector<8x32xf32>,
    } else {
    }
    %c0 = arith.constant 0 : index
    %c0_1 = arith.constant 0 : index
    %3 = vector.load %arg22[%c0, %c0_1] : memref<8x32xf32, #tpu.memory_space<vmem>>, vector<8x32xf32>
    %4 = arith.truncf %3 : vector<8x32xf32> to vector<8x32xbf16>
    %c0_2 = arith.constant 0 : index
    %c0_3 = arith.constant 0 : index
    %c0_4 = arith.constant 0 : index
    %5 = vector.load %arg5[%c0_2, %c0_3, %c0_4] : memref<1x32x96xbf16, #tpu.memory_space<vmem>>, vector<1x32x96xbf16>
    %6 = vector.shape_cast %5 : vector<1x32x96xbf16> to vector<32x96xbf16>
    %cst = arith.constant dense<0.000000e+00> : vector<8x96xf32>
    %7 = tpu.matmul %4, %6, %cst {dimension_numbers = #tpu.dot_dimension_numbers<[1], [0], [0], [1], [0, 0, 1, 1], [], []>} : vector<8x32xbf16>, vector<32x96xbf16>, vector<8x96xf32> -> vector<8x96xf32>
    %c0_5 = arith.constant 0 : index
    %c0_6 = arith.constant 0 : index
    %c0_7 = arith.constant 0 : index
    %8 = vector.load %arg6[%c0_5, %c0_6, %c0_7] : memref<1x1x96xf32, #tpu.memory_space<vmem>>, vector<1x1x96xf32>
    %9 = vector.shape_cast %8 : vector<1x1x96xf32> to vector<1x96xf32>
    %10 = vector.broadcast %9 : vector<1x96xf32> to vector<8x96xf32>
    %11 = arith.addf %7, %10 : vector<8x96xf32>
    %12 = vector.extract_strided_slice %11 {offsets = [0, 0], sizes = [8, 16], strides = [1, 1]} : vector<8x96xf32> to vector<8x16xf32>
    %13 = arith.truncf %12 : vector<8x16xf32> to vector<8x16xbf16>
    %14 = vector.extract_strided_slice %11 {offsets = [0, 32], sizes = [8, 16], strides = [1, 1]} : vector<8x96xf32> to vector<8x16xf32>
    %15 = arith.truncf %14 : vector<8x16xf32> to vector<8x16xbf16>
    %16 = vector.extract_strided_slice %11 {offsets = [0, 64], sizes = [8, 16], strides = [1, 1]} : vector<8x96xf32> to vector<8x16xf32>
    %17 = arith.truncf %16 : vector<8x16xf32> to vector<8x16xbf16>
    %cst_8 = arith.constant dense<0.000000e+00> : vector<8x8xf32>
    %18 = tpu.matmul %13, %15, %cst_8 {dimension_numbers = #tpu.dot_dimension_numbers<[1], [1], [0], [0], [0, 0, 1, 0], [], []>} : vector<8x16xbf16>, vector<8x16xbf16>, vector<8x8xf32> -> vector<8x8xf32>
    %cst_9 = arith.constant 2.500000e-01 : f32
    %19 = vector.broadcast %cst_9 : f32 to vector<8x8xf32>
    %20 = arith.mulf %18, %19 : vector<8x8xf32>
    %cst_10 = arith.constant dense<0xFF800000> : vector<8xf32>
    %21 = vector.multi_reduction <maximumf>, %20, %cst_10 [1] : vector<8x8xf32> to vector<8xf32>
    %22 = vector.shape_cast %21 : vector<8xf32> to vector<8x1xf32>
    %23 = vector.broadcast %22 : vector<8x1xf32> to vector<8x8xf32>
    %24 = arith.subf %20, %23 : vector<8x8xf32>
    %25 = math.exp %24 : vector<8x8xf32>
    %cst_11 = arith.constant dense<0.000000e+00> : vector<8xf32>
    %26 = vector.multi_reduction <add>, %25, %cst_11 [1] : vector<8x8xf32> to vector<8xf32>
    %27 = vector.shape_cast %26 : vector<8xf32> to vector<8x1xf32>
    %28 = tpu.reciprocal %27 {approx = true} : vector<8x1xf32> -> vector<8x1xf32>
    %29 = vector.broadcast %28 : vector<8x1xf32> to vector<8x8xf32>
    %30 = arith.mulf %25, %29 : vector<8x8xf32>
    %31 = arith.truncf %30 : vector<8x8xf32> to vector<8x8xbf16>
    %cst_12 = arith.constant dense<0.000000e+00> : vector<8x16xf32>
    %32 = tpu.matmul %31, %17, %cst_12 {dimension_numbers = #tpu.dot_dimension_numbers<[1], [0], [0], [1], [0, 0, 1, 1], [], []>} : vector<8x8xbf16>, vector<8x16xbf16>, vector<8x16xf32> -> vector<8x16xf32>
    %33 = vector.extract_strided_slice %11 {offsets = [0, 16], sizes = [8, 16], strides = [1, 1]} : vector<8x96xf32> to vector<8x16xf32>
    %34 = arith.truncf %33 : vector<8x16xf32> to vector<8x16xbf16>
    %35 = vector.extract_strided_slice %11 {offsets = [0, 48], sizes = [8, 16], strides = [1, 1]} : vector<8x96xf32> to vector<8x16xf32>
    %36 = arith.truncf %35 : vector<8x16xf32> to vector<8x16xbf16>
    %37 = vector.extract_strided_slice %11 {offsets = [0, 80], sizes = [8, 16], strides = [1, 1]} : vector<8x96xf32> to vector<8x16xf32>
    %38 = arith.truncf %37 : vector<8x16xf32> to vector<8x16xbf16>
    %cst_13 = arith.constant dense<0.000000e+00> : vector<8x8xf32>
    %39 = tpu.matmul %34, %36, %cst_13 {dimension_numbers = #tpu.dot_dimension_numbers<[1], [1], [0], [0], [0, 0, 1, 0], [], []>} : vector<8x16xbf16>, vector<8x16xbf16>, vector<8x8xf32> -> vector<8x8xf32>
    %cst_14 = arith.constant 2.500000e-01 : f32
    %40 = vector.broadcast %cst_14 : f32 to vector<8x8xf32>
    %41 = arith.mulf %39, %40 : vector<8x8xf32>
    %cst_15 = arith.constant dense<0xFF800000> : vector<8xf32>
    %42 = vector.multi_reduction <maximumf>, %41, %cst_15 [1] : vector<8x8xf32> to vector<8xf32>
    %43 = vector.shape_cast %42 : vector<8xf32> to vector<8x1xf32>
    %44 = vector.broadcast %43 : vector<8x1xf32> to vector<8x8xf32>
    %45 = arith.subf %41, %44 : vector<8x8xf32>
    %46 = math.exp %45 : vector<8x8xf32>
    %cst_16 = arith.constant dense<0.000000e+00> : vector<8xf32>
    %47 = vector.multi_reduction <add>, %46, %cst_16 [1] : vector<8x8xf32> to vector<8xf32>
    %48 = vector.shape_cast %47 : vector<8xf32> to vector<8x1xf32>
    %49 = tpu.reciprocal %48 {approx = true} : vector<8x1xf32> -> vector<8x1xf32>
    %50 = vector.broadcast %49 : vector<8x1xf32> to vector<8x8xf32>
    %51 = arith.mulf %46, %50 : vector<8x8xf32>
    %52 = arith.truncf %51 : vector<8x8xf32> to vector<8x8xbf16>
    %cst_17 = arith.constant dense<0.000000e+00> : vector<8x16xf32>
    %53 = tpu.matmul %52, %38, %cst_17 {dimension_numbers = #tpu.dot_dimension_numbers<[1], [0], [0], [1], [0, 0, 1, 1], [], []>} : vector<8x8xbf16>, vector<8x16xbf16>, vector<8x16xf32> -> vector<8x16xf32>
    %54 = tpu.concatenate %32, %53 in 1 : vector<8x16xf32>, vector<8x16xf32> -> vector<8x32xf32>
    %55 = arith.truncf %54 : vector<8x32xf32> to vector<8x32xbf16>
    %c0_18 = arith.constant 0 : index
    %c0_19 = arith.constant 0 : index
    %c0_20 = arith.constant 0 : index
    %56 = vector.load %arg7[%c0_18, %c0_19, %c0_20] : memref<1x32x32xbf16, #tpu.memory_space<vmem>>, vector<1x32x32xbf16>
    %57 = vector.shape_cast %56 : vector<1x32x32xbf16> to vector<32x32xbf16>
    %cst_21 = arith.constant dense<0.000000e+00> : vector<8x32xf32>
    %58 = tpu.matmul %55, %57, %cst_21 {dimension_numbers = #tpu.dot_dimension_numbers<[1], [0], [0], [1], [0, 0, 1, 1], [], []>} : vector<8x32xbf16>, vector<32x32xbf16>, vector<8x32xf32> -> vector<8x32xf32>
    %c0_22 = arith.constant 0 : index
    %c0_23 = arith.constant 0 : index
    %c0_24 = arith.constant 0 : index
    %59 = vector.load %arg8[%c0_22, %c0_23, %c0_24] : memref<1x1x32xf32, #tpu.memory_space<vmem>>, vector<1x1x32xf32>
    %60 = vector.shape_cast %59 : vector<1x1x32xf32> to vector<1x32xf32>
    %61 = vector.broadcast %60 : vector<1x32xf32> to vector<8x32xf32>
    %62 = arith.addf %58, %61 : vector<8x32xf32>
    %63 = arith.addf %62, %3 : vector<8x32xf32>
    %c0_25 = arith.constant 0 : index
    %c0_26 = arith.constant 0 : index
    %c0_27 = arith.constant 0 : index
    %64 = vector.load %arg9[%c0_25, %c0_26, %c0_27] : memref<1x1x32xf32, #tpu.memory_space<vmem>>, vector<1x1x32xf32>
    %65 = vector.shape_cast %64 : vector<1x1x32xf32> to vector<1x32xf32>
    %c0_28 = arith.constant 0 : index
    %c0_29 = arith.constant 0 : index
    %c0_30 = arith.constant 0 : index
    %66 = vector.load %arg10[%c0_28, %c0_29, %c0_30] : memref<1x1x32xf32, #tpu.memory_space<vmem>>, vector<1x1x32xf32>
    %67 = vector.shape_cast %66 : vector<1x1x32xf32> to vector<1x32xf32>
    %cst_31 = arith.constant dense<0.000000e+00> : vector<8xf32>
    %68 = vector.multi_reduction <add>, %63, %cst_31 [1] : vector<8x32xf32> to vector<8xf32>
    %69 = vector.shape_cast %68 : vector<8xf32> to vector<8x1xf32>
    %cst_32 = arith.constant 3.200000e+01 : f32
    %70 = vector.broadcast %cst_32 : f32 to vector<8x1xf32>
    %71 = arith.divf %69, %70 : vector<8x1xf32>
    %72 = vector.broadcast %71 : vector<8x1xf32> to vector<8x32xf32>
    %73 = arith.subf %63, %72 : vector<8x32xf32>
    %74 = arith.mulf %73, %73 : vector<8x32xf32>
    %cst_33 = arith.constant dense<0.000000e+00> : vector<8xf32>
    %75 = vector.multi_reduction <add>, %74, %cst_33 [1] : vector<8x32xf32> to vector<8xf32>
    %76 = vector.shape_cast %75 : vector<8xf32> to vector<8x1xf32>
    %cst_34 = arith.constant 3.200000e+01 : f32
    %77 = vector.broadcast %cst_34 : f32 to vector<8x1xf32>
    %78 = arith.divf %76, %77 : vector<8x1xf32>
    %cst_35 = arith.constant 9.99999996E-13 : f32
    %79 = vector.broadcast %cst_35 : f32 to vector<8x1xf32>
    %80 = arith.addf %78, %79 : vector<8x1xf32>
    %81 = math.rsqrt %80 : vector<8x1xf32>
    %82 = vector.broadcast %81 : vector<8x1xf32> to vector<8x32xf32>
    %83 = arith.mulf %73, %82 : vector<8x32xf32>
    %84 = vector.broadcast %65 : vector<1x32xf32> to vector<8x32xf32>
    %85 = arith.mulf %83, %84 : vector<8x32xf32>
    %86 = vector.broadcast %67 : vector<1x32xf32> to vector<8x32xf32>
    %87 = arith.addf %85, %86 : vector<8x32xf32>
    %88 = arith.truncf %87 : vector<8x32xf32> to vector<8x32xbf16>
    %c0_36 = arith.constant 0 : index
    %c0_37 = arith.constant 0 : index
    %c0_38 = arith.constant 0 : index
    %89 = vector.load %arg11[%c0_36, %c0_37, %c0_38] : memref<1x32x128xbf16, #tpu.memory_space<vmem>>, vector<1x32x128xbf16>
    %90 = vector.shape_cast %89 : vector<1x32x128xbf16> to vector<32x128xbf16>
    %cst_39 = arith.constant dense<0.000000e+00> : vector<8x128xf32>
    %91 = tpu.matmul %88, %90, %cst_39 {dimension_numbers = #tpu.dot_dimension_numbers<[1], [0], [0], [1], [0, 0, 1, 1], [], []>} : vector<8x32xbf16>, vector<32x128xbf16>, vector<8x128xf32> -> vector<8x128xf32>
    %c0_40 = arith.constant 0 : index
    %c0_41 = arith.constant 0 : index
    %c0_42 = arith.constant 0 : index
    %92 = vector.load %arg12[%c0_40, %c0_41, %c0_42] : memref<1x1x128xf32, #tpu.memory_space<vmem>>, vector<1x1x128xf32>
    %93 = vector.shape_cast %92 : vector<1x1x128xf32> to vector<1x128xf32>
    %94 = vector.broadcast %93 : vector<1x128xf32> to vector<8x128xf32>
    %95 = arith.addf %91, %94 : vector<8x128xf32>
    %cst_43 = arith.constant 5.000000e-01 : f32
    %96 = vector.broadcast %cst_43 : f32 to vector<8x128xf32>
    %97 = arith.mulf %96, %95 : vector<8x128xf32>
    %cst_44 = arith.constant 0.707106769 : f32
    %98 = vector.broadcast %cst_44 : f32 to vector<8x128xf32>
    %99 = arith.mulf %95, %98 : vector<8x128xf32>
    %100 = math.erf %99 : vector<8x128xf32>
    %cst_45 = arith.constant 1.000000e+00 : f32
    %101 = vector.broadcast %cst_45 : f32 to vector<8x128xf32>
    %102 = arith.addf %101, %100 : vector<8x128xf32>
    %103 = arith.mulf %97, %102 : vector<8x128xf32>
    %104 = arith.truncf %103 : vector<8x128xf32> to vector<8x128xbf16>
    %c0_46 = arith.constant 0 : index
    %c0_47 = arith.constant 0 : index
    %c0_48 = arith.constant 0 : index
    %105 = vector.load %arg13[%c0_46, %c0_47, %c0_48] : memref<1x128x32xbf16, #tpu.memory_space<vmem>>, vector<1x128x32xbf16>
    %106 = vector.shape_cast %105 : vector<1x128x32xbf16> to vector<128x32xbf16>
    %cst_49 = arith.constant dense<0.000000e+00> : vector<8x32xf32>
    %107 = tpu.matmul %104, %106, %cst_49 {dimension_numbers = #tpu.dot_dimension_numbers<[1], [0], [0], [1], [0, 0, 1, 1], [], []>} : vector<8x128xbf16>, vector<128x32xbf16>, vector<8x32xf32> -> vector<8x32xf32>
    %c0_50 = arith.constant 0 : index
    %c0_51 = arith.constant 0 : index
    %c0_52 = arith.constant 0 : index
    %108 = vector.load %arg14[%c0_50, %c0_51, %c0_52] : memref<1x1x32xf32, #tpu.memory_space<vmem>>, vector<1x1x32xf32>
    %109 = vector.shape_cast %108 : vector<1x1x32xf32> to vector<1x32xf32>
    %110 = vector.broadcast %109 : vector<1x32xf32> to vector<8x32xf32>
    %111 = arith.addf %107, %110 : vector<8x32xf32>
    %112 = arith.addf %111, %87 : vector<8x32xf32>
    %c0_53 = arith.constant 0 : index
    %c0_54 = arith.constant 0 : index
    %c0_55 = arith.constant 0 : index
    %113 = vector.load %arg15[%c0_53, %c0_54, %c0_55] : memref<1x1x32xf32, #tpu.memory_space<vmem>>, vector<1x1x32xf32>
    %114 = vector.shape_cast %113 : vector<1x1x32xf32> to vector<1x32xf32>
    %c0_56 = arith.constant 0 : index
    %c0_57 = arith.constant 0 : index
    %c0_58 = arith.constant 0 : index
    %115 = vector.load %arg16[%c0_56, %c0_57, %c0_58] : memref<1x1x32xf32, #tpu.memory_space<vmem>>, vector<1x1x32xf32>
    %116 = vector.shape_cast %115 : vector<1x1x32xf32> to vector<1x32xf32>
    %cst_59 = arith.constant dense<0.000000e+00> : vector<8xf32>
    %117 = vector.multi_reduction <add>, %112, %cst_59 [1] : vector<8x32xf32> to vector<8xf32>
    %118 = vector.shape_cast %117 : vector<8xf32> to vector<8x1xf32>
    %cst_60 = arith.constant 3.200000e+01 : f32
    %119 = vector.broadcast %cst_60 : f32 to vector<8x1xf32>
    %120 = arith.divf %118, %119 : vector<8x1xf32>
    %121 = vector.broadcast %120 : vector<8x1xf32> to vector<8x32xf32>
    %122 = arith.subf %112, %121 : vector<8x32xf32>
    %123 = arith.mulf %122, %122 : vector<8x32xf32>
    %cst_61 = arith.constant dense<0.000000e+00> : vector<8xf32>
    %124 = vector.multi_reduction <add>, %123, %cst_61 [1] : vector<8x32xf32> to vector<8xf32>
    %125 = vector.shape_cast %124 : vector<8xf32> to vector<8x1xf32>
    %cst_62 = arith.constant 3.200000e+01 : f32
    %126 = vector.broadcast %cst_62 : f32 to vector<8x1xf32>
    %127 = arith.divf %125, %126 : vector<8x1xf32>
    %cst_63 = arith.constant 9.99999996E-13 : f32
    %128 = vector.broadcast %cst_63 : f32 to vector<8x1xf32>
    %129 = arith.addf %127, %128 : vector<8x1xf32>
    %130 = math.rsqrt %129 : vector<8x1xf32>
    %131 = vector.broadcast %130 : vector<8x1xf32> to vector<8x32xf32>
    %132 = arith.mulf %122, %131 : vector<8x32xf32>
    %133 = vector.broadcast %114 : vector<1x32xf32> to vector<8x32xf32>
    %134 = arith.mulf %132, %133 : vector<8x32xf32>
    %135 = vector.broadcast %116 : vector<1x32xf32> to vector<8x32xf32>
    %136 = arith.addf %134, %135 : vector<8x32xf32>
    %c0_64 = arith.constant 0 : index
    %c0_65 = arith.constant 0 : index
    %137 = vector.load %arg22[%c0_64, %c0_65] : memref<8x32xf32, #tpu.memory_space<vmem>>, vector<8x32xf32>
    tpu.vector_store %arg22[%c0_64, %c0_65], %136 {strides = array<i32>} : memref<8x32xf32, #tpu.memory_space<vmem>>, vector<8x32xf32>,
    %c1_i32 = arith.constant 1 : i32
    %138 = arith.cmpi eq, %arg1, %c1_i32 : i32
    %139 = arith.extui %138 : i1 to i32
    %c0_i32_66 = arith.constant 0 : i32
    %140 = arith.cmpi ne, %139, %c0_i32_66 : i32
    scf.if %140 {
      %141 = vector.extract_strided_slice %136 {offsets = [0, 0], sizes = [1, 32], strides = [1, 1]} : vector<8x32xf32> to vector<1x32xf32>
      %142 = arith.truncf %141 : vector<1x32xf32> to vector<1x32xbf16>
      %c0_67 = arith.constant 0 : index
      %c0_68 = arith.constant 0 : index
      %143 = vector.load %arg17[%c0_67, %c0_68] : memref<32x32xbf16, #tpu.memory_space<vmem>>, vector<32x32xbf16>
      %cst_69 = arith.constant dense<0.000000e+00> : vector<1x32xf32>
      %144 = tpu.matmul %142, %143, %cst_69 {dimension_numbers = #tpu.dot_dimension_numbers<[1], [0], [0], [1], [0, 0, 1, 1], [], []>} : vector<1x32xbf16>, vector<32x32xbf16>, vector<1x32xf32> -> vector<1x32xf32>
      %c0_70 = arith.constant 0 : index
      %c0_71 = arith.constant 0 : index
      %145 = vector.load %arg18[%c0_70, %c0_71] : memref<1x32xf32, #tpu.memory_space<vmem>>, vector<1x32xf32>
      %146 = arith.addf %144, %145 : vector<1x32xf32>
      %147 = math.tanh %146 : vector<1x32xf32>
      %148 = arith.truncf %147 : vector<1x32xf32> to vector<1x32xbf16>
      %c0_72 = arith.constant 0 : index
      %c0_73 = arith.constant 0 : index
      %149 = vector.load %arg19[%c0_72, %c0_73] : memref<32x128xbf16, #tpu.memory_space<vmem>>, vector<32x128xbf16>
      %cst_74 = arith.constant dense<0.000000e+00> : vector<1x128xf32>
      %150 = tpu.matmul %148, %149, %cst_74 {dimension_numbers = #tpu.dot_dimension_numbers<[1], [0], [0], [1], [0, 0, 1, 1], [], []>} : vector<1x32xbf16>, vector<32x128xbf16>, vector<1x128xf32> -> vector<1x128xf32>
      %c0_75 = arith.constant 0 : index
      %c0_76 = arith.constant 0 : index
      %151 = vector.load %arg20[%c0_75, %c0_76] : memref<1x128xf32, #tpu.memory_space<vmem>>, vector<1x128xf32>
      %152 = arith.addf %150, %151 : vector<1x128xf32>
      %153 = vector.shape_cast %152 : vector<1x128xf32> to vector<1x1x128xf32>
      %c0_77 = arith.constant 0 : index
      %c0_78 = arith.constant 0 : index
      %c0_79 = arith.constant 0 : index
      %154 = vector.load %arg21[%c0_77, %c0_78, %c0_79] : memref<1x1x128xf32, #tpu.memory_space<vmem>>, vector<1x1x128xf32>
      tpu.vector_store %arg21[%c0_77, %c0_78, %c0_79], %153 {strides = array<i32>} : memref<1x1x128xf32, #tpu.memory_space<vmem>>, vector<1x1x128xf32>,
    } else {
    }
    return
  }
  func.func @transform_0(%arg0: i32, %arg1: i32) -> (i32, i32, i32) {
    %c0_i32 = arith.constant 0 : i32
    %c0_i32_0 = arith.constant 0 : i32
    %c0_i32_1 = arith.constant 0 : i32
    return %arg0, %c0_i32, %c0_i32_0 : i32, i32, i32
  }
  func.func @transform_1(%arg0: i32, %arg1: i32) -> (i32, i32) {
    %c0_i32 = arith.constant 0 : i32
    %c0_i32_0 = arith.constant 0 : i32
    %c0_i32_1 = arith.constant 0 : i32
    return %c0_i32, %c0_i32_0 : i32, i32
  }
  func.func @transform_2(%arg0: i32, %arg1: i32) -> (i32, i32) {
    %c0_i32 = arith.constant 0 : i32
    %c0_i32_0 = arith.constant 0 : i32
    %c0_i32_1 = arith.constant 0 : i32
    return %c0_i32, %c0_i32_0 : i32, i32
  }
  func.func @transform_3(%arg0: i32, %arg1: i32) -> (i32, i32, i32) {
    %c0_i32 = arith.constant 0 : i32
    %c0_i32_0 = arith.constant 0 : i32
    %c0_i32_1 = arith.constant 0 : i32
    return %arg1, %c0_i32, %c0_i32_0 : i32, i32, i32
  }
  func.func @transform_4(%arg0: i32, %arg1: i32) -> (i32, i32, i32) {
    %c0_i32 = arith.constant 0 : i32
    %c0_i32_0 = arith.constant 0 : i32
    %c0_i32_1 = arith.constant 0 : i32
    return %arg1, %c0_i32, %c0_i32_0 : i32, i32, i32
  }
  func.func @transform_5(%arg0: i32, %arg1: i32) -> (i32, i32, i32) {
    %c0_i32 = arith.constant 0 : i32
    %c0_i32_0 = arith.constant 0 : i32
    %c0_i32_1 = arith.constant 0 : i32
    return %arg1, %c0_i32, %c0_i32_0 : i32, i32, i32
  }
  func.func @transform_6(%arg0: i32, %arg1: i32) -> (i32, i32, i32) {
    %c0_i32 = arith.constant 0 : i32
    %c0_i32_0 = arith.constant 0 : i32
    %c0_i32_1 = arith.constant 0 : i32
    return %arg1, %c0_i32, %c0_i32_0 : i32, i32, i32
  }
  func.func @transform_7(%arg0: i32, %arg1: i32) -> (i32, i32, i32) {
    %c0_i32 = arith.constant 0 : i32
    %c0_i32_0 = arith.constant 0 : i32
    %c0_i32_1 = arith.constant 0 : i32
    return %arg1, %c0_i32, %c0_i32_0 : i32, i32, i32
  }
  func.func @transform_8(%arg0: i32, %arg1: i32) -> (i32, i32, i32) {
    %c0_i32 = arith.constant 0 : i32
    %c0_i32_0 = arith.constant 0 : i32
    %c0_i32_1 = arith.constant 0 : i32
    return %arg1, %c0_i32, %c0_i32_0 : i32, i32, i32
  }
  func.func @transform_9(%arg0: i32, %arg1: i32) -> (i32, i32, i32) {
    %c0_i32 = arith.constant 0 : i32
    %c0_i32_0 = arith.constant 0 : i32
    %c0_i32_1 = arith.constant 0 : i32
    return %arg1, %c0_i32, %c0_i32_0 : i32, i32, i32
  }
  func.func @transform_10(%arg0: i32, %arg1: i32) -> (i32, i32, i32) {
    %c0_i32 = arith.constant 0 : i32
    %c0_i32_0 = arith.constant 0 : i32
    %c0_i32_1 = arith.constant 0 : i32
    return %arg1, %c0_i32, %c0_i32_0 : i32, i32, i32
  }
  func.func @transform_11(%arg0: i32, %arg1: i32) -> (i32, i32, i32) {
    %c0_i32 = arith.constant 0 : i32
    %c0_i32_0 = arith.constant 0 : i32
    %c0_i32_1 = arith.constant 0 : i32
    return %arg1, %c0_i32, %c0_i32_0 : i32, i32, i32
  }
  func.func @transform_12(%arg0: i32, %arg1: i32) -> (i32, i32, i32) {
    %c0_i32 = arith.constant 0 : i32
    %c0_i32_0 = arith.constant 0 : i32
    %c0_i32_1 = arith.constant 0 : i32
    return %arg1, %c0_i32, %c0_i32_0 : i32, i32, i32
  }
  func.func @transform_13(%arg0: i32, %arg1: i32) -> (i32, i32, i32) {
    %c0_i32 = arith.constant 0 : i32
    %c0_i32_0 = arith.constant 0 : i32
    %c0_i32_1 = arith.constant 0 : i32
    return %arg1, %c0_i32, %c0_i32_0 : i32, i32, i32
  }
  func.func @transform_14(%arg0: i32, %arg1: i32) -> (i32, i32, i32) {
    %c0_i32 = arith.constant 0 : i32
    %c0_i32_0 = arith.constant 0 : i32
    %c0_i32_1 = arith.constant 0 : i32
    return %arg1, %c0_i32, %c0_i32_0 : i32, i32, i32
  }
  func.func @transform_15(%arg0: i32, %arg1: i32) -> (i32, i32) {
    %c0_i32 = arith.constant 0 : i32
    %c0_i32_0 = arith.constant 0 : i32
    %c0_i32_1 = arith.constant 0 : i32
    return %c0_i32, %c0_i32_0 : i32, i32
  }
  func.func @transform_16(%arg0: i32, %arg1: i32) -> (i32, i32) {
    %c0_i32 = arith.constant 0 : i32
    %c0_i32_0 = arith.constant 0 : i32
    %c0_i32_1 = arith.constant 0 : i32
    return %c0_i32, %c0_i32_0 : i32, i32
  }
  func.func @transform_17(%arg0: i32, %arg1: i32) -> (i32, i32) {
    %c0_i32 = arith.constant 0 : i32
    %c0_i32_0 = arith.constant 0 : i32
    %c0_i32_1 = arith.constant 0 : i32
    return %c0_i32, %c0_i32_0 : i32, i32
  }
  func.func @transform_18(%arg0: i32, %arg1: i32) -> (i32, i32) {
    %c0_i32 = arith.constant 0 : i32
    %c0_i32_0 = arith.constant 0 : i32
    %c0_i32_1 = arith.constant 0 : i32
    return %c0_i32, %c0_i32_0 : i32, i32
  }
  func.func @transform_19(%arg0: i32, %arg1: i32) -> (i32, i32, i32) {
    %c0_i32 = arith.constant 0 : i32
    %c0_i32_0 = arith.constant 0 : i32
    %c0_i32_1 = arith.constant 0 : i32
    return %arg0, %c0_i32, %c0_i32_0 : i32, i32, i32
  }
}

</mosaic_0001>

<llo_original>
// kernel: tpu_custom_call.1
$region0: #{tpu_custom_call.1}
  #allocation0 [shape = 'u32[]', space=smem, size = 0x4, offset = 0x4, fixed_abs, tag = 'smem constant byte address 0x4 - core index']
  #allocation1 [shape = 'u32[144,128]{1,0:T(1,128)}', space=vmem, size = 0x12000, scoped, tag = 'internal scratch']
  #allocation2 [shape = 'f32[8,32]{1,0:T(8,128)}', space=vmem, size = 0x1000, scoped, tag = 'scratch operand']
  %s0 = inlined_call_operand.vmem [shape: f32[2,8,32], index: 0, kind: input, shape index: {}]
  %s1 = inlined_call_operand.vmem [shape: f32[1,32], index: 1, kind: input, shape index: {}]
  %s2 = inlined_call_operand.vmem [shape: f32[1,32], index: 2, kind: input, shape index: {}]
  %s3 = inlined_call_operand.vmem [shape: bf16[2,32,96], index: 3, kind: input, shape index: {}]
  %s4 = inlined_call_operand.vmem [shape: f32[2,1,96], index: 4, kind: input, shape index: {}]
  %s5 = inlined_call_operand.vmem [shape: bf16[2,32,32], index: 5, kind: input, shape index: {}]
  %s6 = inlined_call_operand.vmem [shape: f32[2,1,32], index: 6, kind: input, shape index: {}]
  %s7 = inlined_call_operand.vmem [shape: f32[2,1,32], index: 7, kind: input, shape index: {}]
  %s8 = inlined_call_operand.vmem [shape: f32[2,1,32], index: 8, kind: input, shape index: {}]
  %s9 = inlined_call_operand.vmem [shape: bf16[2,32,128], index: 9, kind: input, shape index: {}]
  %s10 = inlined_call_operand.vmem [shape: f32[2,1,128], index: 10, kind: input, shape index: {}]
  %s11 = inlined_call_operand.vmem [shape: bf16[2,128,32], index: 11, kind: input, shape index: {}]
  %s12 = inlined_call_operand.vmem [shape: f32[2,1,32], index: 12, kind: input, shape index: {}]
  %s13 = inlined_call_operand.vmem [shape: f32[2,1,32], index: 13, kind: input, shape index: {}]
  %s14 = inlined_call_operand.vmem [shape: f32[2,1,32], index: 14, kind: input, shape index: {}]
  %s15 = inlined_call_operand.vmem [shape: bf16[32,32], index: 15, kind: input, shape index: {}]
  %s16 = inlined_call_operand.vmem [shape: f32[1,32], index: 16, kind: input, shape index: {}]
  %s17 = inlined_call_operand.vmem [shape: bf16[32,128], index: 17, kind: input, shape index: {}]
  %s18 = inlined_call_operand.vmem [shape: f32[1,128], index: 18, kind: input, shape index: {}]
  %s19 = inlined_call_operand.hbm [shape: f32[2,1,128], index: 19, kind: output, shape index: {}]
  %s20 = sld [smem:[#allocation0]]
  $region117: #{tpu_custom_call.1} parent=0
    _
  %s22 = ssub.s32 1, %s20
  %s23 = scalar_select 0, %s22, %s20
  $region1: #{tpu_custom_call.1} parent=0
    #allocation3 [shape = 'u8[1024]{0}', space=vmem, size = 0x400, scoped, tag = 'output window, operand 0']
    #allocation4 [shape = 's32[2]{0}', space=sflag, size = 0x8, scoped, tag = 'scoped memory for tpu_custom_call.1']
    %24 = vsyncpa [#allocation4], 0
    %s25 = scalar_lea.sflag [#allocation4], 1
    %26 = vsyncpa %s25, 0
    loop: start=0, step=1, limit=6
    $region2: #{tpu_custom_call.1} parent=1 // loop_pre_header
      _
    $region3: #{tpu_custom_call.1} parent=1 // loop_header
      %s28 = sphi 0, %s32
      %p29 = scmp.ge.s32.totalorder %s28, 6
      %s35 = sphi 0, %s47
      %s36 = sphi 0, %s43
      %s37 = sphi 0, %s35
      %s38 = sphi 0, %s36
      %s39 = sphi 0, %s37
      %s40 = sphi 0, %s38
      %s50 = sphi 0, %s52
      %s53 = sphi 0, %s50
      %s54 = sphi 0, %s53
      %s70 = sphi 0, %s54
      %s74 = sphi 0, %s74
      %s76 = sphi 0, %s74
      %s77 = sphi 0, %s76
      %s91 = sphi 0, %s77
      %s95 = sphi 0, %s95
      %s97 = sphi 0, %s95
      %s98 = sphi 0, %s97
      %s112 = sphi 0, %s98
      %s118 = sphi 0, %s120
      %s121 = sphi 0, %s118
      %s122 = sphi 0, %s121
      %s138 = sphi 0, %s122
      %s144 = sphi 0, %s146
      %s147 = sphi 0, %s144
      %s148 = sphi 0, %s147
      %s164 = sphi 0, %s148
      %s170 = sphi 0, %s172
      %s173 = sphi 0, %s170
      %s174 = sphi 0, %s173
      %s190 = sphi 0, %s174
      %s196 = sphi 0, %s198
      %s199 = sphi 0, %s196
      %s200 = sphi 0, %s199
      %s216 = sphi 0, %s200
      %s222 = sphi 0, %s224
      %s225 = sphi 0, %s222
      %s226 = sphi 0, %s225
      %s242 = sphi 0, %s226
      %s248 = sphi 0, %s250
      %s251 = sphi 0, %s248
      %s252 = sphi 0, %s251
      %s268 = sphi 0, %s252
      %s274 = sphi 0, %s276
      %s277 = sphi 0, %s274
      %s278 = sphi 0, %s277
      %s294 = sphi 0, %s278
      %s300 = sphi 0, %s302
      %s303 = sphi 0, %s300
      %s304 = sphi 0, %s303
      %s320 = sphi 0, %s304
      %s326 = sphi 0, %s328
      %s329 = sphi 0, %s326
      %s330 = sphi 0, %s329
      %s346 = sphi 0, %s330
      %s352 = sphi 0, %s354
      %s355 = sphi 0, %s352
      %s356 = sphi 0, %s355
      %s372 = sphi 0, %s356
      %s378 = sphi 0, %s380
      %s381 = sphi 0, %s378
      %s382 = sphi 0, %s381
      %s398 = sphi 0, %s382
      %s404 = sphi 0, %s406
      %s407 = sphi 0, %s404
      %s408 = sphi 0, %s407
      %s424 = sphi 0, %s408
      %s428 = sphi 0, %s428
      %s430 = sphi 0, %s428
      %s431 = sphi 0, %s430
      %s445 = sphi 0, %s431
      %s449 = sphi 0, %s449
      %s451 = sphi 0, %s449
      %s452 = sphi 0, %s451
      %s466 = sphi 0, %s452
      %s470 = sphi 0, %s470
      %s472 = sphi 0, %s470
      %s473 = sphi 0, %s472
      %s487 = sphi 0, %s473
      %s491 = sphi 0, %s491
      %s493 = sphi 0, %s491
      %s494 = sphi 0, %s493
      %s508 = sphi 0, %s494
      %s514 = sphi 0, %s516
      %s517 = sphi 0, %s514
      %s518 = sphi 0, %s517
      %s534 = sphi 0, %s518
    $region4: #{tpu_custom_call.1} parent=1 // loop_header_branch
      %31 = sbr.rel (%p29) target = $region8
    $region5: #{tpu_custom_call.1} parent=1 // loop_body
      %s33 = ssub.s32 %s28, 1
      %s34 = ssub.s32 %s28, 2
      %s41 = sadd.s32 1, %s36
      %p42 = scmp.ge.s32.totalorder %s41, 2
      %s43 = scalar_select %p42, 0, %s41
      %s44 = sadd.s32 1, %s35
      %s45 = scalar_select %p42, %s44, %s35
      %p46 = scmp.ge.s32.totalorder %s45, 2
      %s47 = scalar_select %p46, 0, %s45
      %s48 = ssub.s32 %s35, %s47
      %p49 = scmp.eq.s32.totalorder %s48, 0
      %s51 = sadd.s32 %s50, 1
      %s52 = scalar_select %p49, %s50, %s51
      %p55 = pneg %p49
      %p56 = scmp.eq.s32.totalorder %s28, 3
      %p57 = por %p55, %p56
      %p58 = scmp.ne.s32.totalorder %s50, %s53
      %p59 = scmp.eq.s32.totalorder %s28, 0
      %p60 = por %p58, %p59
      %p61 = scmp.ne.s32.totalorder %s50, %s53
      %p62 = scmp.eq.s32.totalorder %s33, 3
      %p63 = por %p61, %p62
      %p64 = scmp.ne.s32.totalorder %s53, %s54
      %p65 = scmp.eq.s32.totalorder %s33, 0
      %p66 = por %p64, %p65
      %p67 = scmp.ne.s32.totalorder %s53, %s54
      %p68 = scmp.eq.s32.totalorder %s34, 3
      %p69 = por %p67, %p68
      %p71 = scmp.ne.s32.totalorder %s54, %s70
      %p72 = scmp.eq.s32.totalorder %s34, 0
      %p73 = por %p71, %p72
      %s75 = sadd.s32 %s74, 1
      %p78 = scmp.eq.s32.totalorder %s28, 3
      %p79 = scmp.ne.s32.totalorder %s74, %s76
      %p80 = scmp.eq.s32.totalorder %s28, 0
      %p81 = por %p79, %p80
      %p82 = scmp.ne.s32.totalorder %s74, %s76
      %p83 = scmp.eq.s32.totalorder %s33, 3
      %p84 = por %p82, %p83
      %p85 = scmp.ne.s32.totalorder %s76, %s77
      %p86 = scmp.eq.s32.totalorder %s33, 0
      %p87 = por %p85, %p86
      %p88 = scmp.ne.s32.totalorder %s76, %s77
      %p89 = scmp.eq.s32.totalorder %s34, 3
      %p90 = por %p88, %p89
      %p92 = scmp.ne.s32.totalorder %s77, %s91
      %p93 = scmp.eq.s32.totalorder %s34, 0
      %p94 = por %p92, %p93
      %s96 = sadd.s32 %s95, 1
      %p99 = scmp.eq.s32.totalorder %s28, 3
      %p100 = scmp.ne.s32.totalorder %s95, %s97
      %p101 = scmp.eq.s32.totalorder %s28, 0
      %p102 = por %p100, %p101
      %p103 = scmp.ne.s32.totalorder %s95, %s97
      %p104 = scmp.eq.s32.totalorder %s33, 3
      %p105 = por %p103, %p104
      %p106 = scmp.ne.s32.totalorder %s97, %s98
      %p107 = scmp.eq.s32.totalorder %s33, 0
      %p108 = por %p106, %p107
      %p109 = scmp.ne.s32.totalorder %s97, %s98
      %p110 = scmp.eq.s32.totalorder %s34, 3
      %p111 = por %p109, %p110
      %p113 = scmp.ne.s32.totalorder %s98, %s112
      %p114 = scmp.eq.s32.totalorder %s34, 0
      %p115 = por %p113, %p114
      %s116 = ssub.s32 %s36, %s43
      %p117 = scmp.eq.s32.totalorder %s116, 0
      %s119 = sadd.s32 %s118, 1
      %s120 = scalar_select %p117, %s118, %s119
      %p123 = pneg %p117
      %p124 = scmp.eq.s32.totalorder %s28, 3
      %p125 = por %p123, %p124
      %p126 = scmp.ne.s32.totalorder %s118, %s121
      %p127 = scmp.eq.s32.totalorder %s28, 0
      %p128 = por %p126, %p127
      %p129 = scmp.ne.s32.totalorder %s118, %s121
      %p130 = scmp.eq.s32.totalorder %s33, 3
      %p131 = por %p129, %p130
      %p132 = scmp.ne.s32.totalorder %s121, %s122
      %p133 = scmp.eq.s32.totalorder %s33, 0
      %p134 = por %p132, %p133
      %p135 = scmp.ne.s32.totalorder %s121, %s122
      %p136 = scmp.eq.s32.totalorder %s34, 3
      %p137 = por %p135, %p136
      %p139 = scmp.ne.s32.totalorder %s122, %s138
      %p140 = scmp.eq.s32.totalorder %s34, 0
      %p141 = por %p139, %p140
      %s142 = ssub.s32 %s36, %s43
      %p143 = scmp.eq.s32.totalorder %s142, 0
      %s145 = sadd.s32 %s144, 1
      %s146 = scalar_select %p143, %s144, %s145
      %p149 = pneg %p143
      %p150 = scmp.eq.s32.totalorder %s28, 3
      %p151 = por %p149, %p150
      %p152 = scmp.ne.s32.totalorder %s144, %s147
      %p153 = scmp.eq.s32.totalorder %s28, 0
      %p154 = por %p152, %p153
      %p155 = scmp.ne.s32.totalorder %s144, %s147
      %p156 = scmp.eq.s32.totalorder %s33, 3
      %p157 = por %p155, %p156
      %p158 = scmp.ne.s32.totalorder %s147, %s148
      %p159 = scmp.eq.s32.totalorder %s33, 0
      %p160 = por %p158, %p159
      %p161 = scmp.ne.s32.totalorder %s147, %s148
      %p162 = scmp.eq.s32.totalorder %s34, 3
      %p163 = por %p161, %p162
      %p165 = scmp.ne.s32.totalorder %s148, %s164
      %p166 = scmp.eq.s32.totalorder %s34, 0
      %p167 = por %p165, %p166
      %s168 = ssub.s32 %s36, %s43
      %p169 = scmp.eq.s32.totalorder %s168, 0
      %s171 = sadd.s32 %s170, 1
      %s172 = scalar_select %p169, %s170, %s171
      %p175 = pneg %p169
      %p176 = scmp.eq.s32.totalorder %s28, 3
      %p177 = por %p175, %p176
      %p178 = scmp.ne.s32.totalorder %s170, %s173
      %p179 = scmp.eq.s32.totalorder %s28, 0
      %p180 = por %p178, %p179
      %p181 = scmp.ne.s32.totalorder %s170, %s173
      %p182 = scmp.eq.s32.totalorder %s33, 3
      %p183 = por %p181, %p182
      %p184 = scmp.ne.s32.totalorder %s173, %s174
      %p185 = scmp.eq.s32.totalorder %s33, 0
      %p186 = por %p184, %p185
      %p187 = scmp.ne.s32.totalorder %s173, %s174
      %p188 = scmp.eq.s32.totalorder %s34, 3
      %p189 = por %p187, %p188
      %p191 = scmp.ne.s32.totalorder %s174, %s190
      %p192 = scmp.eq.s32.totalorder %s34, 0
      %p193 = por %p191, %p192
      %s194 = ssub.s32 %s36, %s43
      %p195 = scmp.eq.s32.totalorder %s194, 0
      %s197 = sadd.s32 %s196, 1
      %s198 = scalar_select %p195, %s196, %s197
      %p201 = pneg %p195
      %p202 = scmp.eq.s32.totalorder %s28, 3
      %p203 = por %p201, %p202
      %p204 = scmp.ne.s32.totalorder %s196, %s199
      %p205 = scmp.eq.s32.totalorder %s28, 0
      %p206 = por %p204, %p205
      %p207 = scmp.ne.s32.totalorder %s196, %s199
      %p208 = scmp.eq.s32.totalorder %s33, 3
      %p209 = por %p207, %p208
      %p210 = scmp.ne.s32.totalorder %s199, %s200
      %p211 = scmp.eq.s32.totalorder %s33, 0
      %p212 = por %p210, %p211
      %p213 = scmp.ne.s32.totalorder %s199, %s200
      %p214 = scmp.eq.s32.totalorder %s34, 3
      %p215 = por %p213, %p214
      %p217 = scmp.ne.s32.totalorder %s200, %s216
      %p218 = scmp.eq.s32.totalorder %s34, 0
      %p219 = por %p217, %p218
      %s220 = ssub.s32 %s36, %s43
      %p221 = scmp.eq.s32.totalorder %s220, 0
      %s223 = sadd.s32 %s222, 1
      %s224 = scalar_select %p221, %s222, %s223
      %p227 = pneg %p221
      %p228 = scmp.eq.s32.totalorder %s28, 3
      %p229 = por %p227, %p228
      %p230 = scmp.ne.s32.totalorder %s222, %s225
      %p231 = scmp.eq.s32.totalorder %s28, 0
      %p232 = por %p230, %p231
      %p233 = scmp.ne.s32.totalorder %s222, %s225
      %p234 = scmp.eq.s32.totalorder %s33, 3
      %p235 = por %p233, %p234
      %p236 = scmp.ne.s32.totalorder %s225, %s226
      %p237 = scmp.eq.s32.totalorder %s33, 0
      %p238 = por %p236, %p237
      %p239 = scmp.ne.s32.totalorder %s225, %s226
      %p240 = scmp.eq.s32.totalorder %s34, 3
      %p241 = por %p239, %p240
      %p243 = scmp.ne.s32.totalorder %s226, %s242
      %p244 = scmp.eq.s32.totalorder %s34, 0
      %p245 = por %p243, %p244
      %s246 = ssub.s32 %s36, %s43
      %p247 = scmp.eq.s32.totalorder %s246, 0
      %s249 = sadd.s32 %s248, 1
      %s250 = scalar_select %p247, %s248, %s249
      %p253 = pneg %p247
      %p254 = scmp.eq.s32.totalorder %s28, 3
      %p255 = por %p253, %p254
      %p256 = scmp.ne.s32.totalorder %s248, %s251
      %p257 = scmp.eq.s32.totalorder %s28, 0
      %p258 = por %p256, %p257
      %p259 = scmp.ne.s32.totalorder %s248, %s251
      %p260 = scmp.eq.s32.totalorder %s33, 3
      %p261 = por %p259, %p260
      %p262 = scmp.ne.s32.totalorder %s251, %s252
      %p263 = scmp.eq.s32.totalorder %s33, 0
      %p264 = por %p262, %p263
      %p265 = scmp.ne.s32.totalorder %s251, %s252
      %p266 = scmp.eq.s32.totalorder %s34, 3
      %p267 = por %p265, %p266
      %p269 = scmp.ne.s32.totalorder %s252, %s268
      %p270 = scmp.eq.s32.totalorder %s34, 0
      %p271 = por %p269, %p270
      %s272 = ssub.s32 %s36, %s43
      %p273 = scmp.eq.s32.totalorder %s272, 0
      %s275 = sadd.s32 %s274, 1
      %s276 = scalar_select %p273, %s274, %s275
      %p279 = pneg %p273
      %p280 = scmp.eq.s32.totalorder %s28, 3
      %p281 = por %p279, %p280
      %p282 = scmp.ne.s32.totalorder %s274, %s277
      %p283 = scmp.eq.s32.totalorder %s28, 0
      %p284 = por %p282, %p283
      %p285 = scmp.ne.s32.totalorder %s274, %s277
      %p286 = scmp.eq.s32.totalorder %s33, 3
      %p287 = por %p285, %p286
      %p288 = scmp.ne.s32.totalorder %s277, %s278
      %p289 = scmp.eq.s32.totalorder %s33, 0
      %p290 = por %p288, %p289
      %p291 = scmp.ne.s32.totalorder %s277, %s278
      %p292 = scmp.eq.s32.totalorder %s34, 3
      %p293 = por %p291, %p292
      %p295 = scmp.ne.s32.totalorder %s278, %s294
      %p296 = scmp.eq.s32.totalorder %s34, 0
      %p297 = por %p295, %p296
      %s298 = ssub.s32 %s36, %s43
      %p299 = scmp.eq.s32.totalorder %s298, 0
      %s301 = sadd.s32 %s300, 1
      %s302 = scalar_select %p299, %s300, %s301
      %p305 = pneg %p299
      %p306 = scmp.eq.s32.totalorder %s28, 3
      %p307 = por %p305, %p306
      %p308 = scmp.ne.s32.totalorder %s300, %s303
      %p309 = scmp.eq.s32.totalorder %s28, 0
      %p310 = por %p308, %p309
      %p311 = scmp.ne.s32.totalorder %s300, %s303
      %p312 = scmp.eq.s32.totalorder %s33, 3
      %p313 = por %p311, %p312
      %p314 = scmp.ne.s32.totalorder %s303, %s304
      %p315 = scmp.eq.s32.totalorder %s33, 0
      %p316 = por %p314, %p315
      %p317 = scmp.ne.s32.totalorder %s303, %s304
      %p318 = scmp.eq.s32.totalorder %s34, 3
      %p319 = por %p317, %p318
      %p321 = scmp.ne.s32.totalorder %s304, %s320
      %p322 = scmp.eq.s32.totalorder %s34, 0
      %p323 = por %p321, %p322
      %s324 = ssub.s32 %s36, %s43
      %p325 = scmp.eq.s32.totalorder %s324, 0
      %s327 = sadd.s32 %s326, 1
      %s328 = scalar_select %p325, %s326, %s327
      %p331 = pneg %p325
      %p332 = scmp.eq.s32.totalorder %s28, 3
      %p333 = por %p331, %p332
      %p334 = scmp.ne.s32.totalorder %s326, %s329
      %p335 = scmp.eq.s32.totalorder %s28, 0
      %p336 = por %p334, %p335
      %p337 = scmp.ne.s32.totalorder %s326, %s329
      %p338 = scmp.eq.s32.totalorder %s33, 3
      %p339 = por %p337, %p338
      %p340 = scmp.ne.s32.totalorder %s329, %s330
      %p341 = scmp.eq.s32.totalorder %s33, 0
      %p342 = por %p340, %p341
      %p343 = scmp.ne.s32.totalorder %s329, %s330
      %p344 = scmp.eq.s32.totalorder %s34, 3
      %p345 = por %p343, %p344
      %p347 = scmp.ne.s32.totalorder %s330, %s346
      %p348 = scmp.eq.s32.totalorder %s34, 0
      %p349 = por %p347, %p348
      %s350 = ssub.s32 %s36, %s43
      %p351 = scmp.eq.s32.totalorder %s350, 0
      %s353 = sadd.s32 %s352, 1
      %s354 = scalar_select %p351, %s352, %s353
      %p357 = pneg %p351
      %p358 = scmp.eq.s32.totalorder %s28, 3
      %p359 = por %p357, %p358
      %p360 = scmp.ne.s32.totalorder %s352, %s355
      %p361 = scmp.eq.s32.totalorder %s28, 0
      %p362 = por %p360, %p361
      %p363 = scmp.ne.s32.totalorder %s352, %s355
      %p364 = scmp.eq.s32.totalorder %s33, 3
      %p365 = por %p363, %p364
      %p366 = scmp.ne.s32.totalorder %s355, %s356
      %p367 = scmp.eq.s32.totalorder %s33, 0
      %p368 = por %p366, %p367
      %p369 = scmp.ne.s32.totalorder %s355, %s356
      %p370 = scmp.eq.s32.totalorder %s34, 3
      %p371 = por %p369, %p370
      %p373 = scmp.ne.s32.totalorder %s356, %s372
      %p374 = scmp.eq.s32.totalorder %s34, 0
      %p375 = por %p373, %p374
      %s376 = ssub.s32 %s36, %s43
      %p377 = scmp.eq.s32.totalorder %s376, 0
      %s379 = sadd.s32 %s378, 1
      %s380 = scalar_select %p377, %s378, %s379
      %p383 = pneg %p377
      %p384 = scmp.eq.s32.totalorder %s28, 3
      %p385 = por %p383, %p384
      %p386 = scmp.ne.s32.totalorder %s378, %s381
      %p387 = scmp.eq.s32.totalorder %s28, 0
      %p388 = por %p386, %p387
      %p389 = scmp.ne.s32.totalorder %s378, %s381
      %p390 = scmp.eq.s32.totalorder %s33, 3
      %p391 = por %p389, %p390
      %p392 = scmp.ne.s32.totalorder %s381, %s382
      %p393 = scmp.eq.s32.totalorder %s33, 0
      %p394 = por %p392, %p393
      %p395 = scmp.ne.s32.totalorder %s381, %s382
      %p396 = scmp.eq.s32.totalorder %s34, 3
      %p397 = por %p395, %p396
      %p399 = scmp.ne.s32.totalorder %s382, %s398
      %p400 = scmp.eq.s32.totalorder %s34, 0
      %p401 = por %p399, %p400
      %s402 = ssub.s32 %s36, %s43
      %p403 = scmp.eq.s32.totalorder %s402, 0
      %s405 = sadd.s32 %s404, 1
      %s406 = scalar_select %p403, %s404, %s405
      %p409 = pneg %p403
      %p410 = scmp.eq.s32.totalorder %s28, 3
      %p411 = por %p409, %p410
      %p412 = scmp.ne.s32.totalorder %s404, %s407
      %p413 = scmp.eq.s32.totalorder %s28, 0
      %p414 = por %p412, %p413
      %p415 = scmp.ne.s32.totalorder %s404, %s407
      %p416 = scmp.eq.s32.totalorder %s33, 3
      %p417 = por %p415, %p416
      %p418 = scmp.ne.s32.totalorder %s407, %s408
      %p419 = scmp.eq.s32.totalorder %s33, 0
      %p420 = por %p418, %p419
      %p421 = scmp.ne.s32.totalorder %s407, %s408
      %p422 = scmp.eq.s32.totalorder %s34, 3
      %p423 = por %p421, %p422
      %p425 = scmp.ne.s32.totalorder %s408, %s424
      %p426 = scmp.eq.s32.totalorder %s34, 0
      %p427 = por %p425, %p426
      %s429 = sadd.s32 %s428, 1
      %p432 = scmp.eq.s32.totalorder %s28, 3
      %p433 = scmp.ne.s32.totalorder %s428, %s430
      %p434 = scmp.eq.s32.totalorder %s28, 0
      %p435 = por %p433, %p434
      %p436 = scmp.ne.s32.totalorder %s428, %s430
      %p437 = scmp.eq.s32.totalorder %s33, 3
      %p438 = por %p436, %p437
      %p439 = scmp.ne.s32.totalorder %s430, %s431
      %p440 = scmp.eq.s32.totalorder %s33, 0
      %p441 = por %p439, %p440
      %p442 = scmp.ne.s32.totalorder %s430, %s431
      %p443 = scmp.eq.s32.totalorder %s34, 3
      %p444 = por %p442, %p443
      %p446 = scmp.ne.s32.totalorder %s431, %s445
      %p447 = scmp.eq.s32.totalorder %s34, 0
      %p448 = por %p446, %p447
      %s450 = sadd.s32 %s449, 1
      %p453 = scmp.eq.s32.totalorder %s28, 3
      %p454 = scmp.ne.s32.totalorder %s449, %s451
      %p455 = scmp.eq.s32.totalorder %s28, 0
      %p456 = por %p454, %p455
      %p457 = scmp.ne.s32.totalorder %s449, %s451
      %p458 = scmp.eq.s32.totalorder %s33, 3
      %p459 = por %p457, %p458
      %p460 = scmp.ne.s32.totalorder %s451, %s452
      %p461 = scmp.eq.s32.totalorder %s33, 0
      %p462 = por %p460, %p461
      %p463 = scmp.ne.s32.totalorder %s451, %s452
      %p464 = scmp.eq.s32.totalorder %s34, 3
      %p465 = por %p463, %p464
      %p467 = scmp.ne.s32.totalorder %s452, %s466
      %p468 = scmp.eq.s32.totalorder %s34, 0
      %p469 = por %p467, %p468
      %s471 = sadd.s32 %s470, 1
      %p474 = scmp.eq.s32.totalorder %s28, 3
      %p475 = scmp.ne.s32.totalorder %s470, %s472
      %p476 = scmp.eq.s32.totalorder %s28, 0
      %p477 = por %p475, %p476
      %p478 = scmp.ne.s32.totalorder %s470, %s472
      %p479 = scmp.eq.s32.totalorder %s33, 3
      %p480 = por %p478, %p479
      %p481 = scmp.ne.s32.totalorder %s472, %s473
      %p482 = scmp.eq.s32.totalorder %s33, 0
      %p483 = por %p481, %p482
      %p484 = scmp.ne.s32.totalorder %s472, %s473
      %p485 = scmp.eq.s32.totalorder %s34, 3
      %p486 = por %p484, %p485
      %p488 = scmp.ne.s32.totalorder %s473, %s487
      %p489 = scmp.eq.s32.totalorder %s34, 0
      %p490 = por %p488, %p489
      %s492 = sadd.s32 %s491, 1
      %p495 = scmp.eq.s32.totalorder %s28, 3
      %p496 = scmp.ne.s32.totalorder %s491, %s493
      %p497 = scmp.eq.s32.totalorder %s28, 0
      %p498 = por %p496, %p497
      %p499 = scmp.ne.s32.totalorder %s491, %s493
      %p500 = scmp.eq.s32.totalorder %s33, 3
      %p501 = por %p499, %p500
      %p502 = scmp.ne.s32.totalorder %s493, %s494
      %p503 = scmp.eq.s32.totalorder %s33, 0
      %p504 = por %p502, %p503
      %p505 = scmp.ne.s32.totalorder %s493, %s494
      %p506 = scmp.eq.s32.totalorder %s34, 3
      %p507 = por %p505, %p506
      %p509 = scmp.ne.s32.totalorder %s494, %s508
      %p510 = scmp.eq.s32.totalorder %s34, 0
      %p511 = por %p509, %p510
      %s512 = ssub.s32 %s35, %s47
      %p513 = scmp.eq.s32.totalorder %s512, 0
      %s515 = sadd.s32 %s514, 1
      %s516 = scalar_select %p513, %s514, %s515
      %p519 = pneg %p513
      %p520 = scmp.eq.s32.totalorder %s28, 3
      %p521 = por %p519, %p520
      %p522 = scmp.ne.s32.totalorder %s514, %s517
      %p523 = scmp.eq.s32.totalorder %s28, 0
      %p524 = por %p522, %p523
      %p525 = scmp.ne.s32.totalorder %s514, %s517
      %p526 = scmp.eq.s32.totalorder %s33, 3
      %p527 = por %p525, %p526
      %p528 = scmp.ne.s32.totalorder %s517, %s518
      %p529 = scmp.eq.s32.totalorder %s33, 0
      %p530 = por %p528, %p529
      %p531 = scmp.ne.s32.totalorder %s517, %s518
      %p532 = scmp.eq.s32.totalorder %s34, 3
      %p533 = por %p531, %p532
      %p535 = scmp.ne.s32.totalorder %s518, %s534
      %p536 = scmp.eq.s32.totalorder %s34, 0
      %p537 = por %p535, %p536
      %p538 = scmp.le.s32.totalorder 1, %s28
      %p539 = scmp.lt.s32.totalorder %s28, 5
      %p540 = pnand %p538, %p539
      %p541 = pneg %p540
      // Predicated region
      $region9: #{tpu_custom_call.1} parent=5 // pred_check
        _
      $region10: #{tpu_custom_call.1} parent=5 // pred_check_branch
        %543 = sbr.rel (%p540) target = $region12
      $region11: #{tpu_custom_call.1} parent=5 // pred_region
        %s544 = ssub.s32 %s28, 1
        // Predicated region
        $region13: #{tpu_custom_call.1} parent=11 // pred_check
          %p545 = pneg %p87
        $region14: #{tpu_custom_call.1} parent=11 // pred_check_branch
          %547 = sbr.rel (%p545) target = $region16
        $region15: #{tpu_custom_call.1} parent=11 // pred_region
          _
        $region16: #{tpu_custom_call.1} parent=11 // pred_fallthru
          _
        // Predicated region
        $region17: #{tpu_custom_call.1} parent=11 // pred_check
          %p548 = pneg %p108
        $region18: #{tpu_custom_call.1} parent=11 // pred_check_branch
          %550 = sbr.rel (%p548) target = $region20
        $region19: #{tpu_custom_call.1} parent=11 // pred_region
          _
        $region20: #{tpu_custom_call.1} parent=11 // pred_fallthru
          _
        // Predicated region
        $region21: #{tpu_custom_call.1} parent=11 // pred_check
          %p551 = pneg %p441
        $region22: #{tpu_custom_call.1} parent=11 // pred_check_branch
          %553 = sbr.rel (%p551) target = $region24
        $region23: #{tpu_custom_call.1} parent=11 // pred_region
          _
        $region24: #{tpu_custom_call.1} parent=11 // pred_fallthru
          _
        // Predicated region
        $region25: #{tpu_custom_call.1} parent=11 // pred_check
          %p554 = pneg %p462
        $region26: #{tpu_custom_call.1} parent=11 // pred_check_branch
          %556 = sbr.rel (%p554) target = $region28
        $region27: #{tpu_custom_call.1} parent=11 // pred_region
          _
        $region28: #{tpu_custom_call.1} parent=11 // pred_fallthru
          _
        // Predicated region
        $region29: #{tpu_custom_call.1} parent=11 // pred_check
          %p557 = pneg %p483
        $region30: #{tpu_custom_call.1} parent=11 // pred_check_branch
          %559 = sbr.rel (%p557) target = $region32
        $region31: #{tpu_custom_call.1} parent=11 // pred_region
          _
        $region32: #{tpu_custom_call.1} parent=11 // pred_fallthru
          _
        // Predicated region
        $region33: #{tpu_custom_call.1} parent=11 // pred_check
          %p560 = pneg %p504
        $region34: #{tpu_custom_call.1} parent=11 // pred_check_branch
          %562 = sbr.rel (%p560) target = $region36
        $region35: #{tpu_custom_call.1} parent=11 // pred_region
          _
        $region36: #{tpu_custom_call.1} parent=11 // pred_fallthru
          _
      $region12: #{tpu_custom_call.1} parent=5 // pred_fallthru
        _
      %p563 = scmp.lt.s32.totalorder %s28, 4
      // Predicated region
      $region37: #{tpu_custom_call.1} parent=5 // pred_check
        %p564 = pneg %p563
      $region38: #{tpu_custom_call.1} parent=5 // pred_check_branch
        %566 = sbr.rel (%p564) target = $region40
      $region39: #{tpu_custom_call.1} parent=5 // pred_region
        // Predicated region
        $region41: #{tpu_custom_call.1} parent=39 // pred_check
          %p567 = pneg %p60
        $region42: #{tpu_custom_call.1} parent=39 // pred_check_branch
          %569 = sbr.rel (%p567) target = $region44
        $region43: #{tpu_custom_call.1} parent=39 // pred_region
          %p570 = scmp.lt.s32.totalorder %s35, 1
          %s571 = scalar_select %p570, %s35, 1
          %s572 = smul.addr %s571, 8
          %s573 = scalar_lea.vmem %s0, %s572
        $region44: #{tpu_custom_call.1} parent=39 // pred_fallthru
          _
        // Predicated region
        $region45: #{tpu_custom_call.1} parent=39 // pred_check
          %p574 = pneg %p128
        $region46: #{tpu_custom_call.1} parent=39 // pred_check_branch
          %576 = sbr.rel (%p574) target = $region48
        $region47: #{tpu_custom_call.1} parent=39 // pred_region
          %p577 = scmp.lt.s32.totalorder %s36, 1
          %s578 = scalar_select %p577, %s36, 1
          %s579 = smul.addr %s578, 4
          %s580 = smul.addr %s579, 4
          %s581 = scalar_lea.vmem %s3, %s580
        $region48: #{tpu_custom_call.1} parent=39 // pred_fallthru
          _
        // Predicated region
        $region49: #{tpu_custom_call.1} parent=39 // pred_check
          %p582 = pneg %p154
        $region50: #{tpu_custom_call.1} parent=39 // pred_check_branch
          %584 = sbr.rel (%p582) target = $region52
        $region51: #{tpu_custom_call.1} parent=39 // pred_region
          %p585 = scmp.lt.s32.totalorder %s36, 1
          %s586 = scalar_select %p585, %s36, 1
          %s587 = scalar_lea.vmem %s4, %s586
        $region52: #{tpu_custom_call.1} parent=39 // pred_fallthru
          _
        // Predicated region
        $region53: #{tpu_custom_call.1} parent=39 // pred_check
          %p588 = pneg %p180
        $region54: #{tpu_custom_call.1} parent=39 // pred_check_branch
          %590 = sbr.rel (%p588) target = $region56
        $region55: #{tpu_custom_call.1} parent=39 // pred_region
          %p591 = scmp.lt.s32.totalorder %s36, 1
          %s592 = scalar_select %p591, %s36, 1
          %s593 = smul.addr %s592, 4
          %s594 = smul.addr %s593, 4
          %s595 = scalar_lea.vmem %s5, %s594
        $region56: #{tpu_custom_call.1} parent=39 // pred_fallthru
          _
        // Predicated region
        $region57: #{tpu_custom_call.1} parent=39 // pred_check
          %p596 = pneg %p206
        $region58: #{tpu_custom_call.1} parent=39 // pred_check_branch
          %598 = sbr.rel (%p596) target = $region60
        $region59: #{tpu_custom_call.1} parent=39 // pred_region
          %p599 = scmp.lt.s32.totalorder %s36, 1
          %s600 = scalar_select %p599, %s36, 1
          %s601 = scalar_lea.vmem %s6, %s600
        $region60: #{tpu_custom_call.1} parent=39 // pred_fallthru
          _
        // Predicated region
        $region61: #{tpu_custom_call.1} parent=39 // pred_check
          %p602 = pneg %p232
        $region62: #{tpu_custom_call.1} parent=39 // pred_check_branch
          %604 = sbr.rel (%p602) target = $region64
        $region63: #{tpu_custom_call.1} parent=39 // pred_region
          %p605 = scmp.lt.s32.totalorder %s36, 1
          %s606 = scalar_select %p605, %s36, 1
          %s607 = scalar_lea.vmem %s7, %s606
        $region64: #{tpu_custom_call.1} parent=39 // pred_fallthru
          _
        // Predicated region
        $region65: #{tpu_custom_call.1} parent=39 // pred_check
          %p608 = pneg %p258
        $region66: #{tpu_custom_call.1} parent=39 // pred_check_branch
          %610 = sbr.rel (%p608) target = $region68
        $region67: #{tpu_custom_call.1} parent=39 // pred_region
          %p611 = scmp.lt.s32.totalorder %s36, 1
          %s612 = scalar_select %p611, %s36, 1
          %s613 = scalar_lea.vmem %s8, %s612
        $region68: #{tpu_custom_call.1} parent=39 // pred_fallthru
          _
        // Predicated region
        $region69: #{tpu_custom_call.1} parent=39 // pred_check
          %p614 = pneg %p284
        $region70: #{tpu_custom_call.1} parent=39 // pred_check_branch
          %616 = sbr.rel (%p614) target = $region72
        $region71: #{tpu_custom_call.1} parent=39 // pred_region
          %p617 = scmp.lt.s32.totalorder %s36, 1
          %s618 = scalar_select %p617, %s36, 1
          %s619 = smul.addr %s618, 4
          %s620 = smul.addr %s619, 4
          %s621 = scalar_lea.vmem %s9, %s620
        $region72: #{tpu_custom_call.1} parent=39 // pred_fallthru
          _
        // Predicated region
        $region73: #{tpu_custom_call.1} parent=39 // pred_check
          %p622 = pneg %p310
        $region74: #{tpu_custom_call.1} parent=39 // pred_check_branch
          %624 = sbr.rel (%p622) target = $region76
        $region75: #{tpu_custom_call.1} parent=39 // pred_region
          %p625 = scmp.lt.s32.totalorder %s36, 1
          %s626 = scalar_select %p625, %s36, 1
          %s627 = scalar_lea.vmem %s10, %s626
        $region76: #{tpu_custom_call.1} parent=39 // pred_fallthru
          _
        // Predicated region
        $region77: #{tpu_custom_call.1} parent=39 // pred_check
          %p628 = pneg %p336
        $region78: #{tpu_custom_call.1} parent=39 // pred_check_branch
          %630 = sbr.rel (%p628) target = $region80
        $region79: #{tpu_custom_call.1} parent=39 // pred_region
          %p631 = scmp.lt.s32.totalorder %s36, 1
          %s632 = scalar_select %p631, %s36, 1
          %s633 = smul.addr %s632, 16
          %s634 = smul.addr %s633, 4
          %s635 = scalar_lea.vmem %s11, %s634
        $region80: #{tpu_custom_call.1} parent=39 // pred_fallthru
          _
        // Predicated region
        $region81: #{tpu_custom_call.1} parent=39 // pred_check
          %p636 = pneg %p362
        $region82: #{tpu_custom_call.1} parent=39 // pred_check_branch
          %638 = sbr.rel (%p636) target = $region84
        $region83: #{tpu_custom_call.1} parent=39 // pred_region
          %p639 = scmp.lt.s32.totalorder %s36, 1
          %s640 = scalar_select %p639, %s36, 1
          %s641 = scalar_lea.vmem %s12, %s640
        $region84: #{tpu_custom_call.1} parent=39 // pred_fallthru
          _
        // Predicated region
        $region85: #{tpu_custom_call.1} parent=39 // pred_check
          %p642 = pneg %p388
        $region86: #{tpu_custom_call.1} parent=39 // pred_check_branch
          %644 = sbr.rel (%p642) target = $region88
        $region87: #{tpu_custom_call.1} parent=39 // pred_region
          %p645 = scmp.lt.s32.totalorder %s36, 1
          %s646 = scalar_select %p645, %s36, 1
          %s647 = scalar_lea.vmem %s13, %s646
        $region88: #{tpu_custom_call.1} parent=39 // pred_fallthru
          _
        // Predicated region
        $region89: #{tpu_custom_call.1} parent=39 // pred_check
          %p648 = pneg %p414
        $region90: #{tpu_custom_call.1} parent=39 // pred_check_branch
          %650 = sbr.rel (%p648) target = $region92
        $region91: #{tpu_custom_call.1} parent=39 // pred_region
          %p651 = scmp.lt.s32.totalorder %s36, 1
          %s652 = scalar_select %p651, %s36, 1
          %s653 = scalar_lea.vmem %s14, %s652
        $region92: #{tpu_custom_call.1} parent=39 // pred_fallthru
          _
      $region40: #{tpu_custom_call.1} parent=5 // pred_fallthru
        _
      %p654 = scmp.le.s32.totalorder 1, %s28
      %p655 = scmp.lt.s32.totalorder %s28, 5
      %p656 = pnand %p654, %p655
      %p657 = pneg %p656
      // Predicated region
      $region93: #{tpu_custom_call.1} parent=5 // pred_check
        _
      $region94: #{tpu_custom_call.1} parent=5 // pred_check_branch
        %659 = sbr.rel (%p656) target = $region96
      $region95: #{tpu_custom_call.1} parent=5 // pred_region
        %s660 = ssub.s32 %s28, 1
        %p661 = scmp.lt.s32.totalorder %s37, 1
        %s662 = scalar_select %p661, %s37, 1
        %s663 = smul.addr %s662, 8
        %s664 = scalar_lea.vmem %s0, %s663
        %p665 = pneg %p66
        %p666 = pneg %p63
        %p667 = pneg %p87
        %p668 = pneg %p84
        %p669 = pneg %p108
        %p670 = pneg %p105
        %p671 = scmp.lt.s32.totalorder %s38, 1
        %s672 = scalar_select %p671, %s38, 1
        %s673 = smul.addr %s672, 4
        %s674 = smul.addr %s673, 4
        %s675 = scalar_lea.vmem %s3, %s674
        %p676 = pneg %p134
        %p677 = pneg %p131
        %p678 = scmp.lt.s32.totalorder %s38, 1
        %s679 = scalar_select %p678, %s38, 1
        %s680 = scalar_lea.vmem %s4, %s679
        %p681 = pneg %p160
        %p682 = pneg %p157
        %p683 = scmp.lt.s32.totalorder %s38, 1
        %s684 = scalar_select %p683, %s38, 1
        %s685 = smul.addr %s684, 4
        %s686 = smul.addr %s685, 4
        %s687 = scalar_lea.vmem %s5, %s686
        %p688 = pneg %p186
        %p689 = pneg %p183
        %p690 = scmp.lt.s32.totalorder %s38, 1
        %s691 = scalar_select %p690, %s38, 1
        %s692 = scalar_lea.vmem %s6, %s691
        %p693 = pneg %p212
        %p694 = pneg %p209
        %p695 = scmp.lt.s32.totalorder %s38, 1
        %s696 = scalar_select %p695, %s38, 1
        %s697 = scalar_lea.vmem %s7, %s696
        %p698 = pneg %p238
        %p699 = pneg %p235
        %p700 = scmp.lt.s32.totalorder %s38, 1
        %s701 = scalar_select %p700, %s38, 1
        %s702 = scalar_lea.vmem %s8, %s701
        %p703 = pneg %p264
        %p704 = pneg %p261
        %p705 = scmp.lt.s32.totalorder %s38, 1
        %s706 = scalar_select %p705, %s38, 1
        %s707 = smul.addr %s706, 4
        %s708 = smul.addr %s707, 4
        %s709 = scalar_lea.vmem %s9, %s708
        %p710 = pneg %p290
        %p711 = pneg %p287
        %p712 = scmp.lt.s32.totalorder %s38, 1
        %s713 = scalar_select %p712, %s38, 1
        %s714 = scalar_lea.vmem %s10, %s713
        %p715 = pneg %p316
        %p716 = pneg %p313
        %p717 = scmp.lt.s32.totalorder %s38, 1
        %s718 = scalar_select %p717, %s38, 1
        %s719 = smul.addr %s718, 16
        %s720 = smul.addr %s719, 4
        %s721 = scalar_lea.vmem %s11, %s720
        %p722 = pneg %p342
        %p723 = pneg %p339
        %p724 = scmp.lt.s32.totalorder %s38, 1
        %s725 = scalar_select %p724, %s38, 1
        %s726 = scalar_lea.vmem %s12, %s725
        %p727 = pneg %p368
        %p728 = pneg %p365
        %p729 = scmp.lt.s32.totalorder %s38, 1
        %s730 = scalar_select %p729, %s38, 1
        %s731 = scalar_lea.vmem %s13, %s730
        %p732 = pneg %p394
        %p733 = pneg %p391
        %p734 = scmp.lt.s32.totalorder %s38, 1
        %s735 = scalar_select %p734, %s38, 1
        %s736 = scalar_lea.vmem %s14, %s735
        %p737 = pneg %p420
        %p738 = pneg %p417
        %p739 = pneg %p441
        %p740 = pneg %p438
        %p741 = pneg %p462
        %p742 = pneg %p459
        %p743 = pneg %p483
        %p744 = pneg %p480
        %p745 = pneg %p504
        %p746 = pneg %p501
        %p747 = pneg %p530
        %p748 = pneg %p527
        %s749 = sand.u32 %s517, 1
        %s750 = scalar_lea.sflag [#allocation4], %s749
        %s751 = sand.u32 %s517, 1
        %s752 = scalar_lea.vmem [#allocation3], %s751
        %p753 = scmp.lt.s32.totalorder %s37, 1
        %s754 = scalar_select %p753, %s37, 1
        %s755 = smul.addr %s754, 8
        %s756 = scalar_lea.vmem %s0, %s755
        %p757 = scmp.lt.s32.totalorder %s38, 1
        %s758 = scalar_select %p757, %s38, 1
        %s759 = smul.addr %s758, 4
        %s760 = smul.addr %s759, 4
        %s761 = scalar_lea.vmem %s3, %s760
        %p762 = scmp.lt.s32.totalorder %s38, 1
        %s763 = scalar_select %p762, %s38, 1
        %s764 = scalar_lea.vmem %s4, %s763
        %p765 = scmp.lt.s32.totalorder %s38, 1
        %s766 = scalar_select %p765, %s38, 1
        %s767 = smul.addr %s766, 4
        %s768 = smul.addr %s767, 4
        %s769 = scalar_lea.vmem %s5, %s768
        %p770 = scmp.lt.s32.totalorder %s38, 1
        %s771 = scalar_select %p770, %s38, 1
        %s772 = scalar_lea.vmem %s6, %s771
        %p773 = scmp.lt.s32.totalorder %s38, 1
        %s774 = scalar_select %p773, %s38, 1
        %s775 = scalar_lea.vmem %s7, %s774
        %p776 = scmp.lt.s32.totalorder %s38, 1
        %s777 = scalar_select %p776, %s38, 1
        %s778 = scalar_lea.vmem %s8, %s777
        %p779 = scmp.lt.s32.totalorder %s38, 1
        %s780 = scalar_select %p779, %s38, 1
        %s781 = smul.addr %s780, 4
        %s782 = smul.addr %s781, 4
        %s783 = scalar_lea.vmem %s9, %s782
        %p784 = scmp.lt.s32.totalorder %s38, 1
        %s785 = scalar_select %p784, %s38, 1
        %s786 = scalar_lea.vmem %s10, %s785
        %p787 = scmp.lt.s32.totalorder %s38, 1
        %s788 = scalar_select %p787, %s38, 1
        %s789 = smul.addr %s788, 16
        %s790 = smul.addr %s789, 4
        %s791 = scalar_lea.vmem %s11, %s790
        %p792 = scmp.lt.s32.totalorder %s38, 1
        %s793 = scalar_select %p792, %s38, 1
        %s794 = scalar_lea.vmem %s12, %s793
        %p795 = scmp.lt.s32.totalorder %s38, 1
        %s796 = scalar_select %p795, %s38, 1
        %s797 = scalar_lea.vmem %s13, %s796
        %p798 = scmp.lt.s32.totalorder %s38, 1
        %s799 = scalar_select %p798, %s38, 1
        %s800 = scalar_lea.vmem %s14, %s799
        %p802 = scmp.eq.s32.totalorder %s38, 0
        // Predicated region
        $region97: #{tpu_custom_call.1} parent=95 // pred_check
          %p803 = pneg %p802
        $region98: #{tpu_custom_call.1} parent=95 // pred_check_branch
          %805 = sbr.rel (%p803) target = $region100
        $region99: #{tpu_custom_call.1} parent=95 // pred_region
          %v806 = vld [vmem:[%s756] sm:$0xff]
          %v807 = vld [vmem:[%s1] sm:$0x1]
          %v808 = vld [vmem:[%s2] sm:$0x1]
          %vm809 = vcmask 261120
          %v810 = vsel %vm809, %v806, 0.0
          %811 = vadd.xlane.f32.xlu0 %v810
          %v812 = vpop.xlane.xlu0 %811
          %v813 = vrcp.pop 32.0
          %v814 = vmul.f32 %v812, %v813
          %v815 = vsub.f32 %v806, %v814
          %v816 = vmul.f32 %v815, %v815
          %v817 = vsel %vm809, %v816, 0.0
          %818 = vadd.xlane.f32.xlu0 %v817
          %v819 = vpop.xlane.xlu0 %818
          %v820 = vmul.f32 %v819, %v813
          %v821 = vadd.f32 %v820, 1e-12
          %v822 = vrsqrt.pop %v821
          %v823 = vmul.f32 %v815, %v822
          %v825 = vlaneseq
          %v826 = vshrl.u32 %v825, 7
          %v827 = vsub.s32 0, %v826
          %v828 = vrot.slane %v807, %v827
          %v830 = vmul.f32 %v823, %v828
          %v832 = vlaneseq
          %v833 = vshrl.u32 %v832, 7
          %v834 = vsub.s32 0, %v833
          %v835 = vrot.slane %v808, %v834
          %v837 = vadd.f32 %v830, %v835
          %838 = vst.msk [vmem:[#allocation2] sm:$0xff] %vm809, %v837
        $region100: #{tpu_custom_call.1} parent=95 // pred_fallthru
          _
        %v839 = vld [vmem:[#allocation2] sm:$0xff]
        %v840 = vpack.c.bf16 %v839, %v839
        %v841 = vld [vmem:[%s761] sm:$0xf]
        %v842 = vld [vmem:[%s761 + $0x4] sm:$0xf]
        %v843 = vld [vmem:[%s761 + $0x8] sm:$0xf]
        %v844 = vld [vmem:[%s761 + $0xc] sm:$0xf]
        %v845 = vld [vmem:[%s764] sm:$0x1]
        %v847 = vlaneseq
        %v848 = vshrl.u32 %v847, 7
        %v849 = vsub.s32 0, %v848
        %v850 = vrot.slane %v845, %v849
        %v856 = vunpack.c.l.b16 %v841
        %v857 = vunpack.c.l.b16 %v842
        %v858 = vunpack.c.l.b16 %v843
        %v859 = vunpack.c.l.b16 %v844
        %v860 = vpack.c.b16 %v857, %v856
        %v861 = vpack.c.b16 %v859, %v858
        %vm864 = vcmask 261120
        %v866 = vsel %vm864, %v840, 0
        %868 = vmatprep.subr.bf16.mxu0 0
        %869 = vmatpush1.bf16.msra.mxu0 0
        %870 = vmatprep.subr.bf16.mxu0 0
        %871 = vmatpush1.bf16.msra.mxu0 0
        %872 = vmatprep.subr.bf16.mxu0 0
        %873 = vmatpush1.bf16.msra.mxu0 0
        %874 = vmatprep.subr.bf16.mxu0 0
        %875 = vmatpush1.bf16.msra.mxu0 0
        %876 = vmatprep.subr.bf16.mxu0 0
        %877 = vmatpush1.bf16.msra.mxu0 0
        %878 = vmatprep.subr.bf16.mxu0 0
        %879 = vmatpush1.bf16.msra.mxu0 0
        %880 = vmatprep.subr.bf16.mxu0 0
        %881 = vmatpush1.bf16.msra.mxu0 %v861
        %882 = vmatprep.subr.bf16.mxu0 0
        %883 = vmatpush1.bf16.msra.mxu0 %v860
        %884 = vmatprep.subr.bf16.mxu0 0
        %885 = vmatpush2.bf16.msra.mxu0 0
        %886 = vmatprep.subr.bf16.mxu0 0
        %887 = vmatpush2.bf16.msra.mxu0 0
        %888 = vmatprep.subr.bf16.mxu0 0
        %889 = vmatpush2.bf16.msra.mxu0 0
        %890 = vmatprep.subr.bf16.mxu0 0
        %891 = vmatpush2.bf16.msra.mxu0 0
        %892 = vmatprep.subr.bf16.mxu0 0
        %893 = vmatpush2.bf16.msra.mxu0 0
        %894 = vmatprep.subr.bf16.mxu0 0
        %895 = vmatpush2.bf16.msra.mxu0 0
        %896 = vmatprep.subr.bf16.mxu0 0
        %897 = vmatpush2.bf16.msra.mxu0 0
        %898 = vmatprep.subr.bf16.mxu0 0
        %899 = vmatpush2.bf16.msra.mxu0 0
        %900 = vmatprep.mubr.bf16.mxu0 0
        %901 = vmatmul.mubr.bf16.gmra.mxu0 %v866
        %v902 = vpop.f32.mrf.mxu0
        %v903 = vadd.f32 %v850, %v902
        %v904 = vpop.f32.mrf.mxu0
        %v905 = vpop.f32.mrf.mxu0
        %v906 = vpop.f32.mrf.mxu0
        %907 = vdwg.mxu0
        %v908 = vpack.c.bf16 %v903, %v903
        %910 = vrot.lane.b32.xlu0 %v908, 96
        %v911 = vpop.permute.xlu0 %910
        %vm912 = vcmask 130048
        %v914 = vsel %vm912, %v908, 0
        %v917 = vsel %vm912, %v911, 0
        %919 = vmatprep.subr.bf16.mxu0 0
        %920 = vmatpush1.bf16.xpose.msra.mxu0 0
        %921 = vmatprep.subr.bf16.mxu0 0
        %922 = vmatpush1.bf16.xpose.msra.mxu0 0
        %923 = vmatprep.subr.bf16.mxu0 0
        %924 = vmatpush1.bf16.xpose.msra.mxu0 0
        %925 = vmatprep.subr.bf16.mxu0 0
        %926 = vmatpush1.bf16.xpose.msra.mxu0 0
        %927 = vmatprep.subr.bf16.mxu0 0
        %928 = vmatpush1.bf16.xpose.msra.mxu0 0
        %929 = vmatprep.subr.bf16.mxu0 0
        %930 = vmatpush1.bf16.xpose.msra.mxu0 0
        %931 = vmatprep.subr.bf16.mxu0 0
        %932 = vmatpush1.bf16.xpose.msra.mxu0 0
        %933 = vmatprep.subr.bf16.mxu0 0
        %934 = vmatpush1.bf16.xpose.msra.mxu0 %v917
        %935 = vmatprep.subr.bf16.mxu0 0
        %936 = vmatpush2.bf16.xpose.msra.mxu0 0
        %937 = vmatprep.subr.bf16.mxu0 0
        %938 = vmatpush2.bf16.xpose.msra.mxu0 0
        %939 = vmatprep.subr.bf16.mxu0 0
        %940 = vmatpush2.bf16.xpose.msra.mxu0 0
        %941 = vmatprep.subr.bf16.mxu0 0
        %942 = vmatpush2.bf16.xpose.msra.mxu0 0
        %943 = vmatprep.subr.bf16.mxu0 0
        %944 = vmatpush2.bf16.xpose.msra.mxu0 0
        %945 = vmatprep.subr.bf16.mxu0 0
        %946 = vmatpush2.bf16.xpose.msra.mxu0 0
        %947 = vmatprep.subr.bf16.mxu0 0
        %948 = vmatpush2.bf16.xpose.msra.mxu0 0
        %949 = vmatprep.subr.bf16.mxu0 0
        %950 = vmatpush2.bf16.xpose.msra.mxu0 0
        %951 = vmatprep.mubr.bf16.mxu0 0
        %952 = vmatmul.mubr.bf16.gmra.mxu0 %v914
        %v953 = vpop.f32.mrf.mxu0
        %v954 = vadd.f32 0.0, %v953
        %v955 = vpop.f32.mrf.mxu0
        %v956 = vpop.f32.mrf.mxu0
        %v957 = vpop.f32.mrf.mxu0
        %958 = vdwg.mxu0
        %v959 = vmul.f32 %v954, 0.25
        %vm960 = vcmask 64512
        %v961 = vsel %vm960, %v959, -inf
        %962 = vmax.xlane.f32.xlu0 %v961
        %v963 = vpop.xlane.xlu0 %962
        %v964 = vsub.f32 %v959, %v963
        %v965 = vmul.f32 %v964, 1.442695
        %v966 = vpow.pop %v965
        %v967 = vsel %vm960, %v966, 0.0
        %968 = vadd.xlane.f32.xlu0 %v967
        %v969 = vpop.xlane.xlu0 %968
        %v970 = vrcp.pop %v969
        %v971 = vmul.f32 %v966, %v970
        %v972 = vpack.c.bf16 %v971, %v971
        %973 = vrot.lane.b32.xlu0 %v908, 64
        %v974 = vpop.permute.xlu0 %973
        %v976 = vsel %vm960, %v972, 0
        %vm978 = vcmask 1043456
        %v980 = vsel %vm978, %v974, 0
        %982 = vmatprep.subr.bf16.mxu0 0
        %983 = vmatpush1.bf16.msra.mxu0 0
        %984 = vmatprep.subr.bf16.mxu0 0
        %985 = vmatpush1.bf16.msra.mxu0 0
        %986 = vmatprep.subr.bf16.mxu0 0
        %987 = vmatpush1.bf16.msra.mxu0 0
        %988 = vmatprep.subr.bf16.mxu0 0
        %989 = vmatpush1.bf16.msra.mxu0 0
        %990 = vmatprep.subr.bf16.mxu0 0
        %991 = vmatpush1.bf16.msra.mxu0 0
        %992 = vmatprep.subr.bf16.mxu0 0
        %993 = vmatpush1.bf16.msra.mxu0 0
        %994 = vmatprep.subr.bf16.mxu0 0
        %995 = vmatpush1.bf16.msra.mxu0 0
        %996 = vmatprep.subr.bf16.mxu0 0
        %997 = vmatpush1.bf16.msra.mxu0 %v980
        %998 = vmatprep.subr.bf16.mxu0 0
        %999 = vmatpush2.bf16.msra.mxu0 0
        %1000 = vmatprep.subr.bf16.mxu0 0
        %1001 = vmatpush2.bf16.msra.mxu0 0
        %1002 = vmatprep.subr.bf16.mxu0 0
        %1003 = vmatpush2.bf16.msra.mxu0 0
        %1004 = vmatprep.subr.bf16.mxu0 0
        %1005 = vmatpush2.bf16.msra.mxu0 0
        %1006 = vmatprep.subr.bf16.mxu0 0
        %1007 = vmatpush2.bf16.msra.mxu0 0
        %1008 = vmatprep.subr.bf16.mxu0 0
        %1009 = vmatpush2.bf16.msra.mxu0 0
        %1010 = vmatprep.subr.bf16.mxu0 0
        %1011 = vmatpush2.bf16.msra.mxu0 0
        %1012 = vmatprep.subr.bf16.mxu0 0
        %1013 = vmatpush2.bf16.msra.mxu0 0
        %1014 = vmatprep.mubr.bf16.mxu0 0
        %1015 = vmatmul.mubr.bf16.gmra.mxu0 %v976
        %v1016 = vpop.f32.mrf.mxu0
        %v1017 = vadd.f32 0.0, %v1016
        %v1018 = vpop.f32.mrf.mxu0
        %v1019 = vpop.f32.mrf.mxu0
        %v1020 = vpop.f32.mrf.mxu0
        %1021 = vdwg.mxu0
        %1022 = vrot.lane.b32.xlu0 %v908, 112
        %v1023 = vpop.permute.xlu0 %1022
        %1024 = vrot.lane.b32.xlu0 %v908, 80
        %v1025 = vpop.permute.xlu0 %1024
        %v1027 = vsel %vm912, %v1023, 0
        %v1030 = vsel %vm912, %v1025, 0
        %1032 = vmatprep.subr.bf16.mxu0 0
        %1033 = vmatpush1.bf16.xpose.msra.mxu0 0
        %1034 = vmatprep.subr.bf16.mxu0 0
        %1035 = vmatpush1.bf16.xpose.msra.mxu0 0
        %1036 = vmatprep.subr.bf16.mxu0 0
        %1037 = vmatpush1.bf16.xpose.msra.mxu0 0
        %1038 = vmatprep.subr.bf16.mxu0 0
        %1039 = vmatpush1.bf16.xpose.msra.mxu0 0
        %1040 = vmatprep.subr.bf16.mxu0 0
        %1041 = vmatpush1.bf16.xpose.msra.mxu0 0
        %1042 = vmatprep.subr.bf16.mxu0 0
        %1043 = vmatpush1.bf16.xpose.msra.mxu0 0
        %1044 = vmatprep.subr.bf16.mxu0 0
        %1045 = vmatpush1.bf16.xpose.msra.mxu0 0
        %1046 = vmatprep.subr.bf16.mxu0 0
        %1047 = vmatpush1.bf16.xpose.msra.mxu0 %v1030
        %1048 = vmatprep.subr.bf16.mxu0 0
        %1049 = vmatpush2.bf16.xpose.msra.mxu0 0
        %1050 = vmatprep.subr.bf16.mxu0 0
        %1051 = vmatpush2.bf16.xpose.msra.mxu0 0
        %1052 = vmatprep.subr.bf16.mxu0 0
        %1053 = vmatpush2.bf16.xpose.msra.mxu0 0
        %1054 = vmatprep.subr.bf16.mxu0 0
        %1055 = vmatpush2.bf16.xpose.msra.mxu0 0
        %1056 = vmatprep.subr.bf16.mxu0 0
        %1057 = vmatpush2.bf16.xpose.msra.mxu0 0
        %1058 = vmatprep.subr.bf16.mxu0 0
        %1059 = vmatpush2.bf16.xpose.msra.mxu0 0
        %1060 = vmatprep.subr.bf16.mxu0 0
        %1061 = vmatpush2.bf16.xpose.msra.mxu0 0
        %1062 = vmatprep.subr.bf16.mxu0 0
        %1063 = vmatpush2.bf16.xpose.msra.mxu0 0
        %1064 = vmatprep.mubr.bf16.mxu0 0
        %1065 = vmatmul.mubr.bf16.gmra.mxu0 %v1027
        %v1066 = vpop.f32.mrf.mxu0
        %v1067 = vadd.f32 0.0, %v1066
        %v1068 = vpop.f32.mrf.mxu0
        %v1069 = vpop.f32.mrf.mxu0
        %v1070 = vpop.f32.mrf.mxu0
        %1071 = vdwg.mxu0
        %v1072 = vmul.f32 %v1067, 0.25
        %v1073 = vsel %vm960, %v1072, -inf
        %1074 = vmax.xlane.f32.xlu0 %v1073
        %v1075 = vpop.xlane.xlu0 %1074
        %v1076 = vsub.f32 %v1072, %v1075
        %v1077 = vmul.f32 %v1076, 1.442695
        %v1078 = vpow.pop %v1077
        %v1079 = vsel %vm960, %v1078, 0.0
        %1080 = vadd.xlane.f32.xlu0 %v1079
        %v1081 = vpop.xlane.xlu0 %1080
        %v1082 = vrcp.pop %v1081
        %v1083 = vmul.f32 %v1078, %v1082
        %v1084 = vpack.c.bf16 %v1083, %v1083
        %1085 = vrot.lane.b32.xlu0 %v908, 48
        %v1086 = vpop.permute.xlu0 %1085
        %v1088 = vsel %vm960, %v1084, 0
        %v1091 = vsel %vm978, %v1086, 0
        %1093 = vmatprep.subr.bf16.mxu0 0
        %1094 = vmatpush1.bf16.msra.mxu0 0
        %1095 = vmatprep.subr.bf16.mxu0 0
        %1096 = vmatpush1.bf16.msra.mxu0 0
        %1097 = vmatprep.subr.bf16.mxu0 0
        %1098 = vmatpush1.bf16.msra.mxu0 0
        %1099 = vmatprep.subr.bf16.mxu0 0
        %1100 = vmatpush1.bf16.msra.mxu0 0
        %1101 = vmatprep.subr.bf16.mxu0 0
        %1102 = vmatpush1.bf16.msra.mxu0 0
        %1103 = vmatprep.subr.bf16.mxu0 0
        %1104 = vmatpush1.bf16.msra.mxu0 0
        %1105 = vmatprep.subr.bf16.mxu0 0
        %1106 = vmatpush1.bf16.msra.mxu0 0
        %1107 = vmatprep.subr.bf16.mxu0 0
        %1108 = vmatpush1.bf16.msra.mxu0 %v1091
        %1109 = vmatprep.subr.bf16.mxu0 0
        %1110 = vmatpush2.bf16.msra.mxu0 0
        %1111 = vmatprep.subr.bf16.mxu0 0
        %1112 = vmatpush2.bf16.msra.mxu0 0
        %1113 = vmatprep.subr.bf16.mxu0 0
        %1114 = vmatpush2.bf16.msra.mxu0 0
        %1115 = vmatprep.subr.bf16.mxu0 0
        %1116 = vmatpush2.bf16.msra.mxu0 0
        %1117 = vmatprep.subr.bf16.mxu0 0
        %1118 = vmatpush2.bf16.msra.mxu0 0
        %1119 = vmatprep.subr.bf16.mxu0 0
        %1120 = vmatpush2.bf16.msra.mxu0 0
        %1121 = vmatprep.subr.bf16.mxu0 0
        %1122 = vmatpush2.bf16.msra.mxu0 0
        %1123 = vmatprep.subr.bf16.mxu0 0
        %1124 = vmatpush2.bf16.msra.mxu0 0
        %1125 = vmatprep.mubr.bf16.mxu0 0
        %1126 = vmatmul.mubr.bf16.gmra.mxu0 %v1088
        %v1127 = vpop.f32.mrf.mxu0
        %v1128 = vadd.f32 0.0, %v1127
        %v1129 = vpop.f32.mrf.mxu0
        %v1130 = vpop.f32.mrf.mxu0
        %v1131 = vpop.f32.mrf.mxu0
        %1132 = vdwg.mxu0
        %1134 = vrot.lane.b32.xlu0 %v1128, 16
        %v1135 = vpop.permute.xlu0 %1134
        %v1137 = vsel %vm912, %v1017, %v1135
        %v1138 = vpack.c.bf16 %v1137, %v1137
        %v1139 = vld [vmem:[%s769] sm:$0xf]
        %v1140 = vld [vmem:[%s769 + $0x4] sm:$0xf]
        %v1141 = vld [vmem:[%s769 + $0x8] sm:$0xf]
        %v1142 = vld [vmem:[%s769 + $0xc] sm:$0xf]
        %v1143 = vld [vmem:[%s772] sm:$0x1]
        %v1145 = vlaneseq
        %v1146 = vshrl.u32 %v1145, 7
        %v1147 = vsub.s32 0, %v1146
        %v1148 = vrot.slane %v1143, %v1147
        %v1154 = vunpack.c.l.b16 %v1139
        %v1155 = vunpack.c.l.b16 %v1140
        %v1156 = vunpack.c.l.b16 %v1141
        %v1157 = vunpack.c.l.b16 %v1142
        %v1158 = vpack.c.b16 %v1155, %v1154
        %v1159 = vpack.c.b16 %v1157, %v1156
        %v1163 = vsel %vm864, %v1138, 0
        %1165 = vmatprep.subr.bf16.mxu0 0
        %1166 = vmatpush1.bf16.msra.mxu0 0
        %1167 = vmatprep.subr.bf16.mxu0 0
        %1168 = vmatpush1.bf16.msra.mxu0 0
        %1169 = vmatprep.subr.bf16.mxu0 0
        %1170 = vmatpush1.bf16.msra.mxu0 0
        %1171 = vmatprep.subr.bf16.mxu0 0
        %1172 = vmatpush1.bf16.msra.mxu0 0
        %1173 = vmatprep.subr.bf16.mxu0 0
        %1174 = vmatpush1.bf16.msra.mxu0 0
        %1175 = vmatprep.subr.bf16.mxu0 0
        %1176 = vmatpush1.bf16.msra.mxu0 0
        %1177 = vmatprep.subr.bf16.mxu0 0
        %1178 = vmatpush1.bf16.msra.mxu0 %v1159
        %1179 = vmatprep.subr.bf16.mxu0 0
        %1180 = vmatpush1.bf16.msra.mxu0 %v1158
        %1181 = vmatprep.subr.bf16.mxu0 0
        %1182 = vmatpush2.bf16.msra.mxu0 0
        %1183 = vmatprep.subr.bf16.mxu0 0
        %1184 = vmatpush2.bf16.msra.mxu0 0
        %1185 = vmatprep.subr.bf16.mxu0 0
        %1186 = vmatpush2.bf16.msra.mxu0 0
        %1187 = vmatprep.subr.bf16.mxu0 0
        %1188 = vmatpush2.bf16.msra.mxu0 0
        %1189 = vmatprep.subr.bf16.mxu0 0
        %1190 = vmatpush2.bf16.msra.mxu0 0
        %1191 = vmatprep.subr.bf16.mxu0 0
        %1192 = vmatpush2.bf16.msra.mxu0 0
        %1193 = vmatprep.subr.bf16.mxu0 0
        %1194 = vmatpush2.bf16.msra.mxu0 0
        %1195 = vmatprep.subr.bf16.mxu0 0
        %1196 = vmatpush2.bf16.msra.mxu0 0
        %1197 = vmatprep.mubr.bf16.mxu0 0
        %1198 = vmatmul.mubr.bf16.gmra.mxu0 %v1163
        %v1199 = vpop.f32.mrf.mxu0
        %v1200 = vadd.f32 %v1148, %v1199
        %v1201 = vpop.f32.mrf.mxu0
        %v1202 = vpop.f32.mrf.mxu0
        %v1203 = vpop.f32.mrf.mxu0
        %1204 = vdwg.mxu0
        %v1205 = vadd.f32 %v1200, %v839
        %v1206 = vld [vmem:[%s775] sm:$0x1]
        %v1207 = vld [vmem:[%s778] sm:$0x1]
        %v1208 = vsel %vm864, %v1205, 0.0
        %1209 = vadd.xlane.f32.xlu0 %v1208
        %v1210 = vpop.xlane.xlu0 %1209
        %v1211 = vrcp.pop 32.0
        %v1212 = vmul.f32 %v1210, %v1211
        %v1213 = vsub.f32 %v1205, %v1212
        %v1214 = vmul.f32 %v1213, %v1213
        %v1215 = vsel %vm864, %v1214, 0.0
        %1216 = vadd.xlane.f32.xlu0 %v1215
        %v1217 = vpop.xlane.xlu0 %1216
        %v1218 = vmul.f32 %v1217, %v1211
        %v1219 = vadd.f32 %v1218, 1e-12
        %v1220 = vrsqrt.pop %v1219
        %v1221 = vmul.f32 %v1213, %v1220
        %v1223 = vlaneseq
        %v1224 = vshrl.u32 %v1223, 7
        %v1225 = vsub.s32 0, %v1224
        %v1226 = vrot.slane %v1206, %v1225
        %v1228 = vmul.f32 %v1221, %v1226
        %v1230 = vlaneseq
        %v1231 = vshrl.u32 %v1230, 7
        %v1232 = vsub.s32 0, %v1231
        %v1233 = vrot.slane %v1207, %v1232
        %v1235 = vadd.f32 %v1228, %v1233
        %v1236 = vpack.c.bf16 %v1235, %v1235
        %v1237 = vld [vmem:[%s783] sm:$0xf]
        %v1238 = vld [vmem:[%s783 + $0x4] sm:$0xf]
        %v1239 = vld [vmem:[%s783 + $0x8] sm:$0xf]
        %v1240 = vld [vmem:[%s783 + $0xc] sm:$0xf]
        %v1241 = vld [vmem:[%s786] sm:$0x1]
        %v1243 = vlaneseq
        %v1244 = vshrl.u32 %v1243, 7
        %v1245 = vsub.s32 0, %v1244
        %v1246 = vrot.slane %v1241, %v1245
        %v1252 = vunpack.c.l.b16 %v1237
        %v1253 = vunpack.c.l.b16 %v1238
        %v1254 = vunpack.c.l.b16 %v1239
        %v1255 = vunpack.c.l.b16 %v1240
        %v1256 = vpack.c.b16 %v1253, %v1252
        %v1257 = vpack.c.b16 %v1255, %v1254
        %v1261 = vsel %vm864, %v1236, 0
        %1263 = vmatprep.subr.bf16.mxu0 0
        %1264 = vmatpush1.bf16.msra.mxu0 0
        %1265 = vmatprep.subr.bf16.mxu0 0
        %1266 = vmatpush1.bf16.msra.mxu0 0
        %1267 = vmatprep.subr.bf16.mxu0 0
        %1268 = vmatpush1.bf16.msra.mxu0 0
        %1269 = vmatprep.subr.bf16.mxu0 0
        %1270 = vmatpush1.bf16.msra.mxu0 0
        %1271 = vmatprep.subr.bf16.mxu0 0
        %1272 = vmatpush1.bf16.msra.mxu0 0
        %1273 = vmatprep.subr.bf16.mxu0 0
        %1274 = vmatpush1.bf16.msra.mxu0 0
        %1275 = vmatprep.subr.bf16.mxu0 0
        %1276 = vmatpush1.bf16.msra.mxu0 %v1257
        %1277 = vmatprep.subr.bf16.mxu0 0
        %1278 = vmatpush1.bf16.msra.mxu0 %v1256
        %1279 = vmatprep.subr.bf16.mxu0 0
        %1280 = vmatpush2.bf16.msra.mxu0 0
        %1281 = vmatprep.subr.bf16.mxu0 0
        %1282 = vmatpush2.bf16.msra.mxu0 0
        %1283 = vmatprep.subr.bf16.mxu0 0
        %1284 = vmatpush2.bf16.msra.mxu0 0
        %1285 = vmatprep.subr.bf16.mxu0 0
        %1286 = vmatpush2.bf16.msra.mxu0 0
        %1287 = vmatprep.subr.bf16.mxu0 0
        %1288 = vmatpush2.bf16.msra.mxu0 0
        %1289 = vmatprep.subr.bf16.mxu0 0
        %1290 = vmatpush2.bf16.msra.mxu0 0
        %1291 = vmatprep.subr.bf16.mxu0 0
        %1292 = vmatpush2.bf16.msra.mxu0 0
        %1293 = vmatprep.subr.bf16.mxu0 0
        %1294 = vmatpush2.bf16.msra.mxu0 0
        %1295 = vmatprep.mubr.bf16.mxu0 0
        %1296 = vmatmul.mubr.bf16.gmra.mxu0 %v1261
        %v1297 = vpop.f32.mrf.mxu0
        %v1298 = vadd.f32 %v1246, %v1297
        %v1299 = vpop.f32.mrf.mxu0
        %v1300 = vpop.f32.mrf.mxu0
        %v1301 = vpop.f32.mrf.mxu0
        %1302 = vdwg.mxu0
        %v1303 = vmul.f32 %v1298, 0.5
        %v1304 = vmul.f32 %v1298, 0.70710677
        %v1305 = verf.f32.pop %v1304
        %v1306 = vadd.f32 %v1305, 1.0
        %v1307 = vmul.f32 %v1303, %v1306
        %v1308 = vpack.c.bf16 %v1307, %v1307
        %v1309 = vld [vmem:[%s791] sm:$0xf]
        %v1310 = vld [vmem:[%s791 + $0x4] sm:$0xf]
        %v1311 = vld [vmem:[%s791 + $0x8] sm:$0xf]
        %v1312 = vld [vmem:[%s791 + $0xc] sm:$0xf]
        %v1313 = vld [vmem:[%s791 + $0x10] sm:$0xf]
        %v1314 = vld [vmem:[%s791 + $0x14] sm:$0xf]
        %v1315 = vld [vmem:[%s791 + $0x18] sm:$0xf]
        %v1316 = vld [vmem:[%s791 + $0x1c] sm:$0xf]
        %v1317 = vld [vmem:[%s791 + $0x20] sm:$0xf]
        %v1318 = vld [vmem:[%s791 + $0x24] sm:$0xf]
        %v1319 = vld [vmem:[%s791 + $0x28] sm:$0xf]
        %v1320 = vld [vmem:[%s791 + $0x2c] sm:$0xf]
        %v1321 = vld [vmem:[%s791 + $0x30] sm:$0xf]
        %v1322 = vld [vmem:[%s791 + $0x34] sm:$0xf]
        %v1323 = vld [vmem:[%s791 + $0x38] sm:$0xf]
        %v1324 = vld [vmem:[%s791 + $0x3c] sm:$0xf]
        %v1325 = vld [vmem:[%s794] sm:$0x1]
        %v1327 = vlaneseq
        %v1328 = vshrl.u32 %v1327, 7
        %v1329 = vsub.s32 0, %v1328
        %v1330 = vrot.slane %v1325, %v1329
        %v1348 = vunpack.c.l.b16 %v1309
        %v1349 = vunpack.c.l.b16 %v1310
        %v1350 = vunpack.c.l.b16 %v1311
        %v1351 = vunpack.c.l.b16 %v1312
        %v1352 = vunpack.c.l.b16 %v1313
        %v1353 = vunpack.c.l.b16 %v1314
        %v1354 = vunpack.c.l.b16 %v1315
        %v1355 = vunpack.c.l.b16 %v1316
        %v1356 = vunpack.c.l.b16 %v1317
        %v1357 = vunpack.c.l.b16 %v1318
        %v1358 = vunpack.c.l.b16 %v1319
        %v1359 = vunpack.c.l.b16 %v1320
        %v1360 = vunpack.c.l.b16 %v1321
        %v1361 = vunpack.c.l.b16 %v1322
        %v1362 = vunpack.c.l.b16 %v1323
        %v1363 = vunpack.c.l.b16 %v1324
        %v1364 = vpack.c.b16 %v1349, %v1348
        %v1365 = vpack.c.b16 %v1351, %v1350
        %v1366 = vpack.c.b16 %v1353, %v1352
        %v1367 = vpack.c.b16 %v1355, %v1354
        %v1368 = vpack.c.b16 %v1357, %v1356
        %v1369 = vpack.c.b16 %v1359, %v1358
        %v1370 = vpack.c.b16 %v1361, %v1360
        %v1371 = vpack.c.b16 %v1363, %v1362
        %1380 = vmatprep.subr.bf16.mxu0 0
        %1381 = vmatpush1.bf16.msra.mxu0 %v1371
        %1382 = vmatprep.subr.bf16.mxu0 0
        %1383 = vmatpush1.bf16.msra.mxu0 %v1370
        %1384 = vmatprep.subr.bf16.mxu0 0
        %1385 = vmatpush1.bf16.msra.mxu0 %v1369
        %1386 = vmatprep.subr.bf16.mxu0 0
        %1387 = vmatpush1.bf16.msra.mxu0 %v1368
        %1388 = vmatprep.subr.bf16.mxu0 0
        %1389 = vmatpush1.bf16.msra.mxu0 %v1367
        %1390 = vmatprep.subr.bf16.mxu0 0
        %1391 = vmatpush1.bf16.msra.mxu0 %v1366
        %1392 = vmatprep.subr.bf16.mxu0 0
        %1393 = vmatpush1.bf16.msra.mxu0 %v1365
        %1394 = vmatprep.subr.bf16.mxu0 0
        %1395 = vmatpush1.bf16.msra.mxu0 %v1364
        %1396 = vmatprep.subr.bf16.mxu0 0
        %1397 = vmatpush2.bf16.msra.mxu0 0
        %1398 = vmatprep.subr.bf16.mxu0 0
        %1399 = vmatpush2.bf16.msra.mxu0 0
        %1400 = vmatprep.subr.bf16.mxu0 0
        %1401 = vmatpush2.bf16.msra.mxu0 0
        %1402 = vmatprep.subr.bf16.mxu0 0
        %1403 = vmatpush2.bf16.msra.mxu0 0
        %1404 = vmatprep.subr.bf16.mxu0 0
        %1405 = vmatpush2.bf16.msra.mxu0 0
        %1406 = vmatprep.subr.bf16.mxu0 0
        %1407 = vmatpush2.bf16.msra.mxu0 0
        %1408 = vmatprep.subr.bf16.mxu0 0
        %1409 = vmatpush2.bf16.msra.mxu0 0
        %1410 = vmatprep.subr.bf16.mxu0 0
        %1411 = vmatpush2.bf16.msra.mxu0 0
        %1412 = vmatprep.mubr.bf16.mxu0 0
        %1413 = vmatmul.mubr.bf16.gmra.mxu0 %v1308
        %v1414 = vpop.f32.mrf.mxu0
        %v1415 = vadd.f32 %v1330, %v1414
        %v1416 = vpop.f32.mrf.mxu0
        %v1417 = vpop.f32.mrf.mxu0
        %v1418 = vpop.f32.mrf.mxu0
        %1419 = vdwg.mxu0
        %v1420 = vadd.f32 %v1415, %v1235
        %v1421 = vld [vmem:[%s797] sm:$0x1]
        %v1422 = vld [vmem:[%s800] sm:$0x1]
        %v1423 = vsel %vm864, %v1420, 0.0
        %1424 = vadd.xlane.f32.xlu0 %v1423
        %v1425 = vpop.xlane.xlu0 %1424
        %v1426 = vmul.f32 %v1425, %v1211
        %v1427 = vsub.f32 %v1420, %v1426
        %v1428 = vmul.f32 %v1427, %v1427
        %v1429 = vsel %vm864, %v1428, 0.0
        %1430 = vadd.xlane.f32.xlu0 %v1429
        %v1431 = vpop.xlane.xlu0 %1430
        %v1432 = vmul.f32 %v1431, %v1211
        %v1433 = vadd.f32 %v1432, 1e-12
        %v1434 = vrsqrt.pop %v1433
        %v1435 = vmul.f32 %v1427, %v1434
        %v1437 = vlaneseq
        %v1438 = vshrl.u32 %v1437, 7
        %v1439 = vsub.s32 0, %v1438
        %v1440 = vrot.slane %v1421, %v1439
        %v1442 = vmul.f32 %v1435, %v1440
        %v1444 = vlaneseq
        %v1445 = vshrl.u32 %v1444, 7
        %v1446 = vsub.s32 0, %v1445
        %v1447 = vrot.slane %v1422, %v1446
        %v1449 = vadd.f32 %v1442, %v1447
        %1450 = vst.msk [vmem:[#allocation2] sm:$0xff] %vm864, %v1449
        %p1451 = scmp.eq.s32.totalorder %s38, 1
        // Predicated region
        $region101: #{tpu_custom_call.1} parent=95 // pred_check
          %p1452 = pneg %p1451
        $region102: #{tpu_custom_call.1} parent=95 // pred_check_branch
          %1454 = sbr.rel (%p1452) target = $region104
        $region103: #{tpu_custom_call.1} parent=95 // pred_region
          %v1455 = vpack.c.bf16 %v1449, %v1449
          %v1456 = vld [vmem:[%s15] sm:$0xf]
          %v1457 = vld [vmem:[%s15 + $0x4] sm:$0xf]
          %v1458 = vld [vmem:[%s15 + $0x8] sm:$0xf]
          %v1459 = vld [vmem:[%s15 + $0xc] sm:$0xf]
          %v1460 = vld [vmem:[%s16] sm:$0x1]
          %v1465 = vunpack.c.l.b16 %v1456
          %v1466 = vunpack.c.l.b16 %v1457
          %v1467 = vunpack.c.l.b16 %v1458
          %v1468 = vunpack.c.l.b16 %v1459
          %v1469 = vpack.c.b16 %v1466, %v1465
          %v1470 = vpack.c.b16 %v1468, %v1467
          %v1474 = vsel %vm864, %v1455, 0
          %1476 = vmatprep.subr.bf16.mxu0 0
          %1477 = vmatpush1.bf16.msra.mxu0 0
          %1478 = vmatprep.subr.bf16.mxu0 0
          %1479 = vmatpush1.bf16.msra.mxu0 0
          %1480 = vmatprep.subr.bf16.mxu0 0
          %1481 = vmatpush1.bf16.msra.mxu0 0
          %1482 = vmatprep.subr.bf16.mxu0 0
          %1483 = vmatpush1.bf16.msra.mxu0 0
          %1484 = vmatprep.subr.bf16.mxu0 0
          %1485 = vmatpush1.bf16.msra.mxu0 0
          %1486 = vmatprep.subr.bf16.mxu0 0
          %1487 = vmatpush1.bf16.msra.mxu0 0
          %1488 = vmatprep.subr.bf16.mxu0 0
          %1489 = vmatpush1.bf16.msra.mxu0 %v1470
          %1490 = vmatprep.subr.bf16.mxu0 0
          %1491 = vmatpush1.bf16.msra.mxu0 %v1469
          %1492 = vmatprep.subr.bf16.mxu0 0
          %1493 = vmatpush2.bf16.msra.mxu0 0
          %1494 = vmatprep.subr.bf16.mxu0 0
          %1495 = vmatpush2.bf16.msra.mxu0 0
          %1496 = vmatprep.subr.bf16.mxu0 0
          %1497 = vmatpush2.bf16.msra.mxu0 0
          %1498 = vmatprep.subr.bf16.mxu0 0
          %1499 = vmatpush2.bf16.msra.mxu0 0
          %1500 = vmatprep.subr.bf16.mxu0 0
          %1501 = vmatpush2.bf16.msra.mxu0 0
          %1502 = vmatprep.subr.bf16.mxu0 0
          %1503 = vmatpush2.bf16.msra.mxu0 0
          %1504 = vmatprep.subr.bf16.mxu0 0
          %1505 = vmatpush2.bf16.msra.mxu0 0
          %1506 = vmatprep.subr.bf16.mxu0 0
          %1507 = vmatpush2.bf16.msra.mxu0 0
          %1508 = vmatprep.mubr.bf16.mxu0 0
          %1509 = vmatmul.mubr.bf16.gmra.mxu0 %v1474
          %v1510 = vpop.f32.mrf.mxu0
          %v1511 = vadd.f32 %v1460, %v1510
          %v1512 = vpop.f32.mrf.mxu0
          %v1513 = vpop.f32.mrf.mxu0
          %v1514 = vpop.f32.mrf.mxu0
          %1515 = vdwg.mxu0
          %v1516 = vtanh.pop %v1511
          %v1517 = vpack.c.bf16 %v1516, %v1516
          %v1518 = vld [vmem:[%s17] sm:$0xf]
          %v1519 = vld [vmem:[%s17 + $0x4] sm:$0xf]
          %v1520 = vld [vmem:[%s17 + $0x8] sm:$0xf]
          %v1521 = vld [vmem:[%s17 + $0xc] sm:$0xf]
          %v1522 = vld [vmem:[%s18] sm:$0x1]
          %v1527 = vunpack.c.l.b16 %v1518
          %v1528 = vunpack.c.l.b16 %v1519
          %v1529 = vunpack.c.l.b16 %v1520
          %v1530 = vunpack.c.l.b16 %v1521
          %v1531 = vpack.c.b16 %v1528, %v1527
          %v1532 = vpack.c.b16 %v1530, %v1529
          %v1536 = vsel %vm864, %v1517, 0
          %1538 = vmatprep.subr.bf16.mxu0 0
          %1539 = vmatpush1.bf16.msra.mxu0 0
          %1540 = vmatprep.subr.bf16.mxu0 0
          %1541 = vmatpush1.bf16.msra.mxu0 0
          %1542 = vmatprep.subr.bf16.mxu0 0
          %1543 = vmatpush1.bf16.msra.mxu0 0
          %1544 = vmatprep.subr.bf16.mxu0 0
          %1545 = vmatpush1.bf16.msra.mxu0 0
          %1546 = vmatprep.subr.bf16.mxu0 0
          %1547 = vmatpush1.bf16.msra.mxu0 0
          %1548 = vmatprep.subr.bf16.mxu0 0
          %1549 = vmatpush1.bf16.msra.mxu0 0
          %1550 = vmatprep.subr.bf16.mxu0 0
          %1551 = vmatpush1.bf16.msra.mxu0 %v1532
          %1552 = vmatprep.subr.bf16.mxu0 0
          %1553 = vmatpush1.bf16.msra.mxu0 %v1531
          %1554 = vmatprep.subr.bf16.mxu0 0
          %1555 = vmatpush2.bf16.msra.mxu0 0
          %1556 = vmatprep.subr.bf16.mxu0 0
          %1557 = vmatpush2.bf16.msra.mxu0 0
          %1558 = vmatprep.subr.bf16.mxu0 0
          %1559 = vmatpush2.bf16.msra.mxu0 0
          %1560 = vmatprep.subr.bf16.mxu0 0
          %1561 = vmatpush2.bf16.msra.mxu0 0
          %1562 = vmatprep.subr.bf16.mxu0 0
          %1563 = vmatpush2.bf16.msra.mxu0 0
          %1564 = vmatprep.subr.bf16.mxu0 0
          %1565 = vmatpush2.bf16.msra.mxu0 0
          %1566 = vmatprep.subr.bf16.mxu0 0
          %1567 = vmatpush2.bf16.msra.mxu0 0
          %1568 = vmatprep.subr.bf16.mxu0 0
          %1569 = vmatpush2.bf16.msra.mxu0 0
          %1570 = vmatprep.mubr.bf16.mxu0 0
          %1571 = vmatmul.mubr.bf16.gmra.mxu0 %v1536
          %v1572 = vpop.f32.mrf.mxu0
          %v1573 = vadd.f32 %v1522, %v1572
          %v1574 = vpop.f32.mrf.mxu0
          %v1575 = vpop.f32.mrf.mxu0
          %v1576 = vpop.f32.mrf.mxu0
          %1577 = vdwg.mxu0
          %1578 = vst [vmem:[%s752] sm:$0x1] %v1573
        $region104: #{tpu_custom_call.1} parent=95 // pred_fallthru
          _
        %s1579 = sand.u32 %s517, 1
        %s1580 = scalar_lea.sflag [#allocation4], %s1579
        %s1581 = sand.u32 %s517, 1
        %s1582 = scalar_lea.vmem [#allocation3], %s1581
        // Predicated region
        $region105: #{tpu_custom_call.1} parent=95 // pred_check
          %p1583 = pneg %p527
        $region106: #{tpu_custom_call.1} parent=95 // pred_check_branch
          %1585 = sbr.rel (%p1583) target = $region108
        $region107: #{tpu_custom_call.1} parent=95 // pred_region
          %s1587 = ssub.s32 16, 16
          %1588 = vsyncadd %s1580, %s1587
          %s1589 = smul.addr %s37, 16
          %s1590 = scalar_lea.hbm %s19, %s1589
          %s1592 = sshll.u32 %s1582, 4
          %s1593 = int_to_ptr.vmem [resolvable:$true] %s1592
          %1595 = dma.vmem_to_hbm [thread:$0]  %s1593, 16, %s1590, %s1580
        $region108: #{tpu_custom_call.1} parent=95 // pred_fallthru
          _
      $region96: #{tpu_custom_call.1} parent=5 // pred_fallthru
        _
      %p1596 = scmp.le.s32.totalorder 2, %s28
      // Predicated region
      $region109: #{tpu_custom_call.1} parent=5 // pred_check
        %p1597 = pneg %p1596
      $region110: #{tpu_custom_call.1} parent=5 // pred_check_branch
        %1599 = sbr.rel (%p1597) target = $region112
      $region111: #{tpu_custom_call.1} parent=5 // pred_region
        %s1600 = ssub.s32 %s28, 2
        // Predicated region
        $region113: #{tpu_custom_call.1} parent=111 // pred_check
          %p1601 = pneg %p533
        $region114: #{tpu_custom_call.1} parent=111 // pred_check_branch
          %1603 = sbr.rel (%p1601) target = $region116
        $region115: #{tpu_custom_call.1} parent=111 // pred_region
          %s1604 = sand.u32 %s518, 1
          %s1605 = scalar_lea.sflag [#allocation4], %s1604
          %s1606 = sand.u32 %s518, 1
          %s1607 = scalar_lea.vmem [#allocation3], %s1606
          %1608 = dma.done %s1605, 16
        $region116: #{tpu_custom_call.1} parent=111 // pred_fallthru
          _
      $region112: #{tpu_custom_call.1} parent=5 // pred_fallthru
        _
    $region6: #{tpu_custom_call.1} parent=1 // loop_footer
      %s32 = sadd.s32 1, %s28
    $region7: #{tpu_custom_call.1} parent=1 // loop_footer_branch
      %27 = sbr.rel target = $region3
    $region8: #{tpu_custom_call.1} parent=1 // loop_exit
      _
    %1609 = vsyncpa [#allocation4], 1
    %s1610 = scalar_lea.sflag [#allocation4], 1
    %1611 = vsyncpa %s1610, 1

</llo_original>
